<compile_context>
chip_gen: v6e
topology: v6e:2x2x1
jax: 0.10.0
libtpu: 0.0.40
codegen_flags: <defaults>
</compile_context>

<pallas_src>
import jax
import jax.numpy as jnp
from jax import lax
from jax.experimental import pallas as pl
from jax.experimental.pallas import tpu as pltpu

B = 8                      # batch
DATA_SHAPE = (4, 8, 8)     # (C, H, W)
D = DATA_SHAPE[0] * DATA_SHAPE[1] * DATA_SHAPE[2]   # 256
HID = 128                  # MLP hidden width (lane-aligned)
N_TIME = 4                 # len(timestamps) -> 3 SDE steps


def _sde_kernel(scal_ref,                          # SMEM (n_steps, 6) scalar table
                noise_ref, x0_ref,                 # VMEM (B, D)
                w1d_ref, b1d_ref, u1d_ref, w2d_ref, b2d_ref,   # drift net
                w1c_ref, b1c_ref, u1c_ref, w2c_ref, b2s_ref,   # fused [drift|score] net
                z_ref, ld_ref):                    # outputs: (B, D) state, (B, 1) logabsdet
    i = pl.program_id(0)

    @pl.when(i == 0)
    def _init():
        z_ref[...] = x0_ref[...]          # x state lives in the resident output block
        ld_ref[...] = jnp.zeros_like(ld_ref)

    dt        = scal_ref[i, 0]
    cond_f    = scal_ref[i, 1]
    cond_b    = scal_ref[i, 2]
    sdt_df    = scal_ref[i, 3]            # sqrt(dt) * diff_f
    neg_db2   = scal_ref[i, 4]            # -diff_b ** 2
    inv_dbsdt = scal_ref[i, 5]            # 1 / (diff_b * sqrt(dt))

    x = z_ref[...]
    noise = noise_ref[...]

    # drift(x, cond_f)
    h0 = jnp.tanh(jnp.dot(x, w1d_ref[...], preferred_element_type=jnp.float32)
                  + b1d_ref[...] + cond_f * u1d_ref[...])
    drift_x = jnp.dot(h0, w2d_ref[...], preferred_element_type=jnp.float32) + b2d_ref[...]

    # z = cal_next_nodiffusion(x, dt, cond_f) + sqrt(dt) * diff_f * forward_noise
    z = x + drift_x * dt + sdt_df * noise

    # fused drift(z, cond_b) - diff_b^2 * score(z, cond_b), 256-lane-wide matmuls
    h = jnp.tanh(jnp.dot(z, w1c_ref[...], preferred_element_type=jnp.float32)
                 + b1c_ref[...] + cond_b * u1c_ref[...])          # (B, 2*HID)
    col = lax.broadcasted_iota(jnp.int32, (1, 2 * HID), 1)
    scale = jnp.where(col < HID, jnp.float32(1.0), neg_db2)       # [1 ... 1 | -db^2 ... -db^2]
    f_backward = (jnp.dot(h * scale, w2c_ref[...], preferred_element_type=jnp.float32)
                  + b2d_ref[...] + neg_db2 * b2s_ref[...])

    # backward_noise = (x - z + f_backward * dt) / (diff_b * sqrt(dt))
    back_noise = (x - z + f_backward * dt) * inv_dbsdt

    # delta_s = -0.5 * (||backward_noise||^2 - ||forward_noise||^2) per batch row
    delta_s = -0.5 * (jnp.sum(back_noise * back_noise, axis=1, keepdims=True)
                      - jnp.sum(noise * noise, axis=1, keepdims=True))

    z_ref[...] = z
    ld_ref[...] = ld_ref[...] + delta_s


def _fused_forward(x_flat, noise, scalars, packed):
    """Single pallas_call running every SDE step of the forward pass."""
    n_steps, bsz, d = noise.shape
    w_specs = [pl.BlockSpec(p.shape, lambda i: (0, 0)) for p in packed]   # weights resident
    grid_spec = pltpu.PrefetchScalarGridSpec(
        num_scalar_prefetch=0,
        grid=(n_steps,),
        in_specs=[
            pl.BlockSpec(memory_space=pltpu.MemorySpace.SMEM),    # per-step scalar table
            pl.BlockSpec((None, bsz, d), lambda i: (i, 0, 0)),    # per-step forward noise
            pl.BlockSpec((bsz, d), lambda i: (0, 0)),             # initial x
        ] + w_specs,
        out_specs=(
            pl.BlockSpec((bsz, d), lambda i: (0, 0)),             # z / resident x state
            pl.BlockSpec((bsz, 1), lambda i: (0, 0)),             # logabsdet accumulator
        ),
    )
    z, ld = pl.pallas_call(
        _sde_kernel,
        grid_spec=grid_spec,
        out_shape=(jax.ShapeDtypeStruct((bsz, d), jnp.float32),
                   jax.ShapeDtypeStruct((bsz, 1), jnp.float32)),
        compiler_params=pltpu.CompilerParams(dimension_semantics=("arbitrary",)),
    )(scalars, noise, x_flat, *packed)
    return z, ld[:, 0]


@jax.jit
def base_model_forward(x, timestamps, diffusion, condition, packed, noise):
    """Mirrors BaseModel.forward; `noise` is the pre-drawn forward noise (n_steps, B, D)."""
    bsz = x.shape[0]
    x_flat = x.reshape(bsz, -1).astype(jnp.float32)
    delta_t = timestamps[1:] - timestamps[:-1]
    sqrt_dt = jnp.sqrt(delta_t)
    diff_f = diffusion[:-1]
    diff_b = diffusion[1:]
    scalars = jnp.stack([
        delta_t,                       # dt
        condition[:-1],                # cond_f
        condition[1:],                 # cond_b
        sqrt_dt * diff_f,              # sqrt(dt) * diff_f
        -(diff_b * diff_b),            # -diff_b^2
        1.0 / (diff_b * sqrt_dt),      # 1 / (diff_b * sqrt(dt))
    ], axis=1).astype(jnp.float32)     # (n_steps, 6)
    z, logabsdet = _fused_forward(x_flat, noise, scalars, packed)
    return z.reshape(x.shape), logabsdet


def init_params(key):
    ks = jax.random.split(key, 4)
    scale_in = 1.0 / jnp.sqrt(jnp.float32(D))
    scale_hid = 1.0 / jnp.sqrt(jnp.float32(HID))
    # drift net
    w1d = jax.random.normal(ks[0], (D, HID), jnp.float32) * scale_in
    b1d = jnp.zeros((1, HID), jnp.float32)
    u1d = jnp.full((1, HID), 0.01, jnp.float32)
    w2d = jax.random.normal(ks[1], (HID, D), jnp.float32) * scale_hid
    b2d = jnp.zeros((1, D), jnp.float32)
    # score net
    w1s = jax.random.normal(ks[2], (D, HID), jnp.float32) * scale_in
    b1s = jnp.zeros((1, HID), jnp.float32)
    u1s = jnp.full((1, HID), -0.01, jnp.float32)
    w2s = jax.random.normal(ks[3], (HID, D), jnp.float32) * scale_hid
    b2s = jnp.zeros((1, D), jnp.float32)
    return (w1d, b1d, u1d, w2d, b2d), (w1s, b1s, u1s, w2s, b2s)


def pack_params(drift_p, score_p):
    """Build the kernel operand tuple: plain drift net + fused [drift|score] net."""
    w1d, b1d, u1d, w2d, b2d = drift_p
    w1s, b1s, u1s, w2s, b2s = score_p
    w1c = jnp.concatenate([w1d, w1s], axis=1)      # (D, 2*HID)
    b1c = jnp.concatenate([b1d, b1s], axis=1)      # (1, 2*HID)
    u1c = jnp.concatenate([u1d, u1s], axis=1)      # (1, 2*HID)
    w2c = jnp.concatenate([w2d, w2s], axis=0)      # (2*HID, D)
    return (w1d, b1d, u1d, w2d, b2d, w1c, b1c, u1c, w2c, b2s)


def reference_forward(x, timestamps, diffusion, condition, drift_p, score_p, noise):
    """Pure-JAX reference using the same pre-drawn noise (for correctness check)."""
    w1d, b1d, u1d, w2d, b2d = drift_p
    w1s, b1s, u1s, w2s, b2s = score_p
    hp = jax.lax.Precision.HIGHEST

    def drift(v, c):
        h = jnp.tanh(jnp.dot(v, w1d, precision=hp) + b1d + c * u1d)
        return jnp.dot(h, w2d, precision=hp) + b2d

    def score(v, c):
        h = jnp.tanh(jnp.dot(v, w1s, precision=hp) + b1s + c * u1s)
        return jnp.dot(h, w2s, precision=hp) + b2s

    bsz = x.shape[0]
    xf = x.reshape(bsz, -1).astype(jnp.float32)
    ld = jnp.zeros((bsz,), jnp.float32)
    dts = timestamps[1:] - timestamps[:-1]
    for i in range(dts.shape[0]):
        dt, cf, cb = dts[i], condition[i], condition[i + 1]
        df, db = diffusion[i], diffusion[i + 1]
        sdt = jnp.sqrt(dt)
        fn = noise[i]
        z = xf + drift(xf, cf) * dt + sdt * df * fn
        fb = drift(z, cb) - db * db * score(z, cb)
        bn = (xf - z + fb * dt) / (db * sdt)
        ld = ld - 0.5 * (jnp.sum(bn * bn, axis=1) - jnp.sum(fn * fn, axis=1))
        xf = z
    return xf.reshape(x.shape), ld


if __name__ == "__main__":
    root = jax.random.PRNGKey(0)
    k_param, k_x, k_noise = jax.random.split(root, 3)

    drift_p, score_p = init_params(k_param)
    packed = pack_params(drift_p, score_p)

    x = jax.random.normal(k_x, (B,) + DATA_SHAPE, jnp.float32)
    timestamps = jnp.linspace(0.0, 0.3, N_TIME, dtype=jnp.float32)
    diffusion = jnp.full((N_TIME,), 0.5, jnp.float32)
    condition = jnp.linspace(-1.0, 1.0, N_TIME, dtype=jnp.float32)

    # TODO(synk): StandardNormal.sample stays as one jax.random.normal call for all steps;
    # fully in-kernel noise (pltpu.prng_random_bits + Box-Muller) would change the stream.
    noise = jax.random.normal(k_noise, (N_TIME - 1, B, D), jnp.float32)

    z_out, logabsdet = base_model_forward(x, timestamps, diffusion, condition, packed, noise)
    jax.block_until_ready((z_out, logabsdet))

    assert z_out.shape == x.shape
    assert logabsdet.shape == (B,)
    assert bool(jnp.all(jnp.isfinite(z_out))) and bool(jnp.all(jnp.isfinite(logabsdet)))

    # Correctness check against pure-JAX reference with the same noise.
    z_ref, ld_ref = reference_forward(x, timestamps, diffusion, condition,
                                      drift_p, score_p, noise)
    assert jnp.allclose(z_out, z_ref, rtol=1e-2, atol=1e-2), \
        float(jnp.max(jnp.abs(z_out - z_ref)))
    assert jnp.allclose(logabsdet, ld_ref, rtol=1e-2, atol=1e-1), \
        float(jnp.max(jnp.abs(logabsdet - ld_ref)))

    print("KERNEL_OK")
</pallas_src>

<mosaic_0001>
module attributes {stable_mosaic.version = 11 : i64} {
  func.func @_sde_kernel(%arg0: i32, %arg1: memref<3x6xf32, #tpu.memory_space<smem>>, %arg2: memref<1x8x256xf32, #tpu.memory_space<vmem>>, %arg3: memref<8x256xf32, #tpu.memory_space<vmem>>, %arg4: memref<256x128xf32, #tpu.memory_space<vmem>>, %arg5: memref<1x128xf32, #tpu.memory_space<vmem>>, %arg6: memref<1x128xf32, #tpu.memory_space<vmem>>, %arg7: memref<128x256xf32, #tpu.memory_space<vmem>>, %arg8: memref<1x256xf32, #tpu.memory_space<vmem>>, %arg9: memref<256x256xf32, #tpu.memory_space<vmem>>, %arg10: memref<1x256xf32, #tpu.memory_space<vmem>>, %arg11: memref<1x256xf32, #tpu.memory_space<vmem>>, %arg12: memref<256x256xf32, #tpu.memory_space<vmem>>, %arg13: memref<1x256xf32, #tpu.memory_space<vmem>>, %arg14: memref<8x256xf32, #tpu.memory_space<vmem>>, %arg15: memref<8x1xf32, #tpu.memory_space<vmem>>) attributes {dimension_semantics = [#tpu.dimension_semantics<arbitrary>], iteration_bounds = array<i64: 3>, scalar_prefetch = 0 : i64, scratch_operands = 0 : i64, tpu.core_type = #tpu.core_type<tc>, window_params = [{transform_indices = @transform_0, window_bounds = array<i64: 3, 6>}, {transform_indices = @transform_1, window_bounds = array<i64: 1, 8, 256>}, {pipeline_mode = #tpu.pipeline_mode<synchronous>, transform_indices = @transform_2, window_bounds = array<i64: 8, 256>}, {pipeline_mode = #tpu.pipeline_mode<synchronous>, transform_indices = @transform_3, window_bounds = array<i64: 256, 128>}, {pipeline_mode = #tpu.pipeline_mode<synchronous>, transform_indices = @transform_4, window_bounds = array<i64: 1, 128>}, {pipeline_mode = #tpu.pipeline_mode<synchronous>, transform_indices = @transform_5, window_bounds = array<i64: 1, 128>}, {pipeline_mode = #tpu.pipeline_mode<synchronous>, transform_indices = @transform_6, window_bounds = array<i64: 128, 256>}, {pipeline_mode = #tpu.pipeline_mode<synchronous>, transform_indices = @transform_7, window_bounds = array<i64: 1, 256>}, {pipeline_mode = #tpu.pipeline_mode<synchronous>, transform_indices = @transform_8, window_bounds = array<i64: 256, 256>}, {pipeline_mode = #tpu.pipeline_mode<synchronous>, transform_indices = @transform_9, window_bounds = array<i64: 1, 256>}, {pipeline_mode = #tpu.pipeline_mode<synchronous>, transform_indices = @transform_10, window_bounds = array<i64: 1, 256>}, {pipeline_mode = #tpu.pipeline_mode<synchronous>, transform_indices = @transform_11, window_bounds = array<i64: 256, 256>}, {pipeline_mode = #tpu.pipeline_mode<synchronous>, transform_indices = @transform_12, window_bounds = array<i64: 1, 256>}, {pipeline_mode = #tpu.pipeline_mode<synchronous>, transform_indices = @transform_13, window_bounds = array<i64: 8, 256>}, {pipeline_mode = #tpu.pipeline_mode<synchronous>, transform_indices = @transform_14, window_bounds = array<i64: 8, 1>}]} {
    %c0_i32 = arith.constant 0 : i32
    %0 = arith.cmpi eq, %arg0, %c0_i32 : i32
    %1 = arith.extui %0 : i1 to i32
    %c0_i32_0 = arith.constant 0 : i32
    %2 = arith.cmpi ne, %1, %c0_i32_0 : i32
    scf.if %2 {
      %c0_41 = arith.constant 0 : index
      %c0_42 = arith.constant 0 : index
      %88 = vector.load %arg3[%c0_41, %c0_42] : memref<8x256xf32, #tpu.memory_space<vmem>>, vector<8x256xf32>
      %c0_43 = arith.constant 0 : index
      %c0_44 = arith.constant 0 : index
      %89 = vector.load %arg14[%c0_43, %c0_44] : memref<8x256xf32, #tpu.memory_space<vmem>>, vector<8x256xf32>
      tpu.vector_store %arg14[%c0_43, %c0_44], %88 {strides = array<i32>} : memref<8x256xf32, #tpu.memory_space<vmem>>, vector<8x256xf32>,
      %cst_45 = arith.constant 0.000000e+00 : f32
      %90 = vector.broadcast %cst_45 : f32 to vector<8x1xf32>
      %c0_46 = arith.constant 0 : index
      %c0_47 = arith.constant 0 : index
      %91 = vector.load %arg15[%c0_46, %c0_47] : memref<8x1xf32, #tpu.memory_space<vmem>>, vector<8x1xf32>
      tpu.vector_store %arg15[%c0_46, %c0_47], %90 {strides = array<i32>} : memref<8x1xf32, #tpu.memory_space<vmem>>, vector<8x1xf32>,
    } else {
    }
    %3 = arith.index_cast %arg0 : i32 to index
    %c0 = arith.constant 0 : index
    %4 = memref.load %arg1[%3, %c0] : memref<3x6xf32, #tpu.memory_space<smem>>
    %5 = arith.index_cast %arg0 : i32 to index
    %c1 = arith.constant 1 : index
    %6 = memref.load %arg1[%5, %c1] : memref<3x6xf32, #tpu.memory_space<smem>>
    %7 = arith.index_cast %arg0 : i32 to index
    %c2 = arith.constant 2 : index
    %8 = memref.load %arg1[%7, %c2] : memref<3x6xf32, #tpu.memory_space<smem>>
    %9 = arith.index_cast %arg0 : i32 to index
    %c3 = arith.constant 3 : index
    %10 = memref.load %arg1[%9, %c3] : memref<3x6xf32, #tpu.memory_space<smem>>
    %11 = arith.index_cast %arg0 : i32 to index
    %c4 = arith.constant 4 : index
    %12 = memref.load %arg1[%11, %c4] : memref<3x6xf32, #tpu.memory_space<smem>>
    %13 = arith.index_cast %arg0 : i32 to index
    %c5 = arith.constant 5 : index
    %14 = memref.load %arg1[%13, %c5] : memref<3x6xf32, #tpu.memory_space<smem>>
    %c0_1 = arith.constant 0 : index
    %c0_2 = arith.constant 0 : index
    %15 = vector.load %arg14[%c0_1, %c0_2] : memref<8x256xf32, #tpu.memory_space<vmem>>, vector<8x256xf32>
    %c0_3 = arith.constant 0 : index
    %c0_4 = arith.constant 0 : index
    %c0_5 = arith.constant 0 : index
    %16 = vector.load %arg2[%c0_3, %c0_4, %c0_5] : memref<1x8x256xf32, #tpu.memory_space<vmem>>, vector<1x8x256xf32>
    %17 = vector.shape_cast %16 : vector<1x8x256xf32> to vector<8x256xf32>
    %c0_6 = arith.constant 0 : index
    %c0_7 = arith.constant 0 : index
    %18 = vector.load %arg4[%c0_6, %c0_7] : memref<256x128xf32, #tpu.memory_space<vmem>>, vector<256x128xf32>
    %cst = arith.constant dense<0.000000e+00> : vector<8x128xf32>
    %19 = tpu.matmul %15, %18, %cst {dimension_numbers = #tpu.dot_dimension_numbers<[1], [0], [0], [1], [0, 0, 1, 1], [], []>} : vector<8x256xf32>, vector<256x128xf32>, vector<8x128xf32> -> vector<8x128xf32>
    %c0_8 = arith.constant 0 : index
    %c0_9 = arith.constant 0 : index
    %20 = vector.load %arg5[%c0_8, %c0_9] : memref<1x128xf32, #tpu.memory_space<vmem>>, vector<1x128xf32>
    %21 = vector.broadcast %20 : vector<1x128xf32> to vector<8x128xf32>
    %22 = arith.addf %19, %21 : vector<8x128xf32>
    %c0_10 = arith.constant 0 : index
    %c0_11 = arith.constant 0 : index
    %23 = vector.load %arg6[%c0_10, %c0_11] : memref<1x128xf32, #tpu.memory_space<vmem>>, vector<1x128xf32>
    %24 = vector.broadcast %6 : f32 to vector<1x128xf32>
    %25 = arith.mulf %24, %23 : vector<1x128xf32>
    %26 = vector.broadcast %25 : vector<1x128xf32> to vector<8x128xf32>
    %27 = arith.addf %22, %26 : vector<8x128xf32>
    %28 = math.tanh %27 : vector<8x128xf32>
    %c0_12 = arith.constant 0 : index
    %c0_13 = arith.constant 0 : index
    %29 = vector.load %arg7[%c0_12, %c0_13] : memref<128x256xf32, #tpu.memory_space<vmem>>, vector<128x256xf32>
    %cst_14 = arith.constant dense<0.000000e+00> : vector<8x256xf32>
    %30 = tpu.matmul %28, %29, %cst_14 {dimension_numbers = #tpu.dot_dimension_numbers<[1], [0], [0], [1], [0, 0, 1, 1], [], []>} : vector<8x128xf32>, vector<128x256xf32>, vector<8x256xf32> -> vector<8x256xf32>
    %c0_15 = arith.constant 0 : index
    %c0_16 = arith.constant 0 : index
    %31 = vector.load %arg8[%c0_15, %c0_16] : memref<1x256xf32, #tpu.memory_space<vmem>>, vector<1x256xf32>
    %32 = vector.broadcast %31 : vector<1x256xf32> to vector<8x256xf32>
    %33 = arith.addf %30, %32 : vector<8x256xf32>
    %34 = vector.broadcast %4 : f32 to vector<8x256xf32>
    %35 = arith.mulf %33, %34 : vector<8x256xf32>
    %36 = arith.addf %15, %35 : vector<8x256xf32>
    %37 = vector.broadcast %10 : f32 to vector<8x256xf32>
    %38 = arith.mulf %37, %17 : vector<8x256xf32>
    %39 = arith.addf %36, %38 : vector<8x256xf32>
    %c0_17 = arith.constant 0 : index
    %c0_18 = arith.constant 0 : index
    %40 = vector.load %arg9[%c0_17, %c0_18] : memref<256x256xf32, #tpu.memory_space<vmem>>, vector<256x256xf32>
    %cst_19 = arith.constant dense<0.000000e+00> : vector<8x256xf32>
    %41 = tpu.matmul %39, %40, %cst_19 {dimension_numbers = #tpu.dot_dimension_numbers<[1], [0], [0], [1], [0, 0, 1, 1], [], []>} : vector<8x256xf32>, vector<256x256xf32>, vector<8x256xf32> -> vector<8x256xf32>
    %c0_20 = arith.constant 0 : index
    %c0_21 = arith.constant 0 : index
    %42 = vector.load %arg10[%c0_20, %c0_21] : memref<1x256xf32, #tpu.memory_space<vmem>>, vector<1x256xf32>
    %43 = vector.broadcast %42 : vector<1x256xf32> to vector<8x256xf32>
    %44 = arith.addf %41, %43 : vector<8x256xf32>
    %c0_22 = arith.constant 0 : index
    %c0_23 = arith.constant 0 : index
    %45 = vector.load %arg11[%c0_22, %c0_23] : memref<1x256xf32, #tpu.memory_space<vmem>>, vector<1x256xf32>
    %46 = vector.broadcast %8 : f32 to vector<1x256xf32>
    %47 = arith.mulf %46, %45 : vector<1x256xf32>
    %48 = vector.broadcast %47 : vector<1x256xf32> to vector<8x256xf32>
    %49 = arith.addf %44, %48 : vector<8x256xf32>
    %50 = math.tanh %49 : vector<8x256xf32>
    %51 = tpu.iota {dimensions = array<i32: 1>} : vector<1x256xi32>
    %c128_i32 = arith.constant 128 : i32
    %52 = vector.broadcast %c128_i32 : i32 to vector<1x256xi32>
    %53 = arith.cmpi slt, %51, %52 : vector<1x256xi32>
    %cst_24 = arith.constant 1.000000e+00 : f32
    %54 = vector.broadcast %cst_24 : f32 to vector<1x256xf32>
    %55 = vector.broadcast %12 : f32 to vector<1x256xf32>
    %56 = arith.select %53, %54, %55 : vector<1x256xi1>, vector<1x256xf32>
    %57 = vector.broadcast %56 : vector<1x256xf32> to vector<8x256xf32>
    %58 = arith.mulf %50, %57 : vector<8x256xf32>
    %c0_25 = arith.constant 0 : index
    %c0_26 = arith.constant 0 : index
    %59 = vector.load %arg12[%c0_25, %c0_26] : memref<256x256xf32, #tpu.memory_space<vmem>>, vector<256x256xf32>
    %cst_27 = arith.constant dense<0.000000e+00> : vector<8x256xf32>
    %60 = tpu.matmul %58, %59, %cst_27 {dimension_numbers = #tpu.dot_dimension_numbers<[1], [0], [0], [1], [0, 0, 1, 1], [], []>} : vector<8x256xf32>, vector<256x256xf32>, vector<8x256xf32> -> vector<8x256xf32>
    %c0_28 = arith.constant 0 : index
    %c0_29 = arith.constant 0 : index
    %61 = vector.load %arg8[%c0_28, %c0_29] : memref<1x256xf32, #tpu.memory_space<vmem>>, vector<1x256xf32>
    %62 = vector.broadcast %61 : vector<1x256xf32> to vector<8x256xf32>
    %63 = arith.addf %60, %62 : vector<8x256xf32>
    %c0_30 = arith.constant 0 : index
    %c0_31 = arith.constant 0 : index
    %64 = vector.load %arg13[%c0_30, %c0_31] : memref<1x256xf32, #tpu.memory_space<vmem>>, vector<1x256xf32>
    %65 = vector.broadcast %12 : f32 to vector<1x256xf32>
    %66 = arith.mulf %65, %64 : vector<1x256xf32>
    %67 = vector.broadcast %66 : vector<1x256xf32> to vector<8x256xf32>
    %68 = arith.addf %63, %67 : vector<8x256xf32>
    %69 = arith.subf %15, %39 : vector<8x256xf32>
    %70 = vector.broadcast %4 : f32 to vector<8x256xf32>
    %71 = arith.mulf %68, %70 : vector<8x256xf32>
    %72 = arith.addf %69, %71 : vector<8x256xf32>
    %73 = vector.broadcast %14 : f32 to vector<8x256xf32>
    %74 = arith.mulf %72, %73 : vector<8x256xf32>
    %75 = arith.mulf %74, %74 : vector<8x256xf32>
    %cst_32 = arith.constant dense<0.000000e+00> : vector<8xf32>
    %76 = vector.multi_reduction <add>, %75, %cst_32 [1] : vector<8x256xf32> to vector<8xf32>
    %77 = vector.shape_cast %76 : vector<8xf32> to vector<8x1xf32>
    %78 = arith.mulf %17, %17 : vector<8x256xf32>
    %cst_33 = arith.constant dense<0.000000e+00> : vector<8xf32>
    %79 = vector.multi_reduction <add>, %78, %cst_33 [1] : vector<8x256xf32> to vector<8xf32>
    %80 = vector.shape_cast %79 : vector<8xf32> to vector<8x1xf32>
    %81 = arith.subf %77, %80 : vector<8x1xf32>
    %cst_34 = arith.constant -5.000000e-01 : f32
    %82 = vector.broadcast %cst_34 : f32 to vector<8x1xf32>
    %83 = arith.mulf %82, %81 : vector<8x1xf32>
    %c0_35 = arith.constant 0 : index
    %c0_36 = arith.constant 0 : index
    %84 = vector.load %arg14[%c0_35, %c0_36] : memref<8x256xf32, #tpu.memory_space<vmem>>, vector<8x256xf32>
    tpu.vector_store %arg14[%c0_35, %c0_36], %39 {strides = array<i32>} : memref<8x256xf32, #tpu.memory_space<vmem>>, vector<8x256xf32>,
    %c0_37 = arith.constant 0 : index
    %c0_38 = arith.constant 0 : index
    %85 = vector.load %arg15[%c0_37, %c0_38] : memref<8x1xf32, #tpu.memory_space<vmem>>, vector<8x1xf32>
    %86 = arith.addf %85, %83 : vector<8x1xf32>
    %c0_39 = arith.constant 0 : index
    %c0_40 = arith.constant 0 : index
    %87 = vector.load %arg15[%c0_39, %c0_40] : memref<8x1xf32, #tpu.memory_space<vmem>>, vector<8x1xf32>
    tpu.vector_store %arg15[%c0_39, %c0_40], %86 {strides = array<i32>} : memref<8x1xf32, #tpu.memory_space<vmem>>, vector<8x1xf32>,
    return
  }
  func.func @transform_0(%arg0: i32) -> (i32, i32) {
    %c0_i32 = arith.constant 0 : i32
    %c0_i32_0 = arith.constant 0 : i32
    %c0_i32_1 = arith.constant 0 : i32
    return %c0_i32, %c0_i32_0 : i32, i32
  }
  func.func @transform_1(%arg0: i32) -> (i32, i32, i32) {
    %c0_i32 = arith.constant 0 : i32
    %c0_i32_0 = arith.constant 0 : i32
    %c0_i32_1 = arith.constant 0 : i32
    return %arg0, %c0_i32, %c0_i32_0 : i32, i32, i32
  }
  func.func @transform_2(%arg0: i32) -> (i32, i32) {
    %c0_i32 = arith.constant 0 : i32
    %c0_i32_0 = arith.constant 0 : i32
    %c0_i32_1 = arith.constant 0 : i32
    return %c0_i32, %c0_i32_0 : i32, i32
  }
  func.func @transform_3(%arg0: i32) -> (i32, i32) {
    %c0_i32 = arith.constant 0 : i32
    %c0_i32_0 = arith.constant 0 : i32
    %c0_i32_1 = arith.constant 0 : i32
    return %c0_i32, %c0_i32_0 : i32, i32
  }
  func.func @transform_4(%arg0: i32) -> (i32, i32) {
    %c0_i32 = arith.constant 0 : i32
    %c0_i32_0 = arith.constant 0 : i32
    %c0_i32_1 = arith.constant 0 : i32
    return %c0_i32, %c0_i32_0 : i32, i32
  }
  func.func @transform_5(%arg0: i32) -> (i32, i32) {
    %c0_i32 = arith.constant 0 : i32
    %c0_i32_0 = arith.constant 0 : i32
    %c0_i32_1 = arith.constant 0 : i32
    return %c0_i32, %c0_i32_0 : i32, i32
  }
  func.func @transform_6(%arg0: i32) -> (i32, i32) {
    %c0_i32 = arith.constant 0 : i32
    %c0_i32_0 = arith.constant 0 : i32
    %c0_i32_1 = arith.constant 0 : i32
    return %c0_i32, %c0_i32_0 : i32, i32
  }
  func.func @transform_7(%arg0: i32) -> (i32, i32) {
    %c0_i32 = arith.constant 0 : i32
    %c0_i32_0 = arith.constant 0 : i32
    %c0_i32_1 = arith.constant 0 : i32
    return %c0_i32, %c0_i32_0 : i32, i32
  }
  func.func @transform_8(%arg0: i32) -> (i32, i32) {
    %c0_i32 = arith.constant 0 : i32
    %c0_i32_0 = arith.constant 0 : i32
    %c0_i32_1 = arith.constant 0 : i32
    return %c0_i32, %c0_i32_0 : i32, i32
  }
  func.func @transform_9(%arg0: i32) -> (i32, i32) {
    %c0_i32 = arith.constant 0 : i32
    %c0_i32_0 = arith.constant 0 : i32
    %c0_i32_1 = arith.constant 0 : i32
    return %c0_i32, %c0_i32_0 : i32, i32
  }
  func.func @transform_10(%arg0: i32) -> (i32, i32) {
    %c0_i32 = arith.constant 0 : i32
    %c0_i32_0 = arith.constant 0 : i32
    %c0_i32_1 = arith.constant 0 : i32
    return %c0_i32, %c0_i32_0 : i32, i32
  }
  func.func @transform_11(%arg0: i32) -> (i32, i32) {
    %c0_i32 = arith.constant 0 : i32
    %c0_i32_0 = arith.constant 0 : i32
    %c0_i32_1 = arith.constant 0 : i32
    return %c0_i32, %c0_i32_0 : i32, i32
  }
  func.func @transform_12(%arg0: i32) -> (i32, i32) {
    %c0_i32 = arith.constant 0 : i32
    %c0_i32_0 = arith.constant 0 : i32
    %c0_i32_1 = arith.constant 0 : i32
    return %c0_i32, %c0_i32_0 : i32, i32
  }
  func.func @transform_13(%arg0: i32) -> (i32, i32) {
    %c0_i32 = arith.constant 0 : i32
    %c0_i32_0 = arith.constant 0 : i32
    %c0_i32_1 = arith.constant 0 : i32
    return %c0_i32, %c0_i32_0 : i32, i32
  }
  func.func @transform_14(%arg0: i32) -> (i32, i32) {
    %c0_i32 = arith.constant 0 : i32
    %c0_i32_0 = arith.constant 0 : i32
    %c0_i32_1 = arith.constant 0 : i32
    return %c0_i32, %c0_i32_0 : i32, i32
  }
}

</mosaic_0001>

<llo_original>
// kernel: base_model_forward.1
$region0: #{base_model_forward.1}
  #allocation0 [shape = 'u32[]', space=smem, size = 0x4, offset = 0x4, fixed_abs, tag = 'smem constant byte address 0x4 - core index']
  #allocation1 [shape = 'u32[144,128]{1,0:T(1,128)}', space=vmem, size = 0x12000, scoped, tag = 'internal scratch']
  %s0 = inlined_call_operand.vmem [shape: f32[3,6], index: 0, kind: input, shape index: {}]
  %s1 = inlined_call_operand.vmem [shape: f32[3,8,256], index: 1, kind: input, shape index: {}]
  %s2 = inlined_call_operand.vmem [shape: f32[8,256], index: 2, kind: input, shape index: {}]
  %s3 = inlined_call_operand.vmem [shape: f32[256,128], index: 3, kind: input, shape index: {}]
  %s4 = inlined_call_operand.vmem [shape: f32[1,128], index: 4, kind: input, shape index: {}]
  %s5 = inlined_call_operand.vmem [shape: f32[1,128], index: 5, kind: input, shape index: {}]
  %s6 = inlined_call_operand.hbm [shape: f32[128,256], index: 6, kind: input, shape index: {}]
  %s7 = inlined_call_operand.vmem [shape: f32[1,256], index: 7, kind: input, shape index: {}]
  %s8 = inlined_call_operand.hbm [shape: f32[256,256], index: 8, kind: input, shape index: {}]
  %s9 = inlined_call_operand.vmem [shape: f32[1,256], index: 9, kind: input, shape index: {}]
  %s10 = inlined_call_operand.vmem [shape: f32[1,256], index: 10, kind: input, shape index: {}]
  %s11 = inlined_call_operand.hbm [shape: f32[256,256], index: 11, kind: input, shape index: {}]
  %s12 = inlined_call_operand.vmem [shape: f32[1,256], index: 12, kind: input, shape index: {}]
  %s13 = inlined_call_operand.vmem [shape: f32[8,256], index: 13, kind: output, shape index: {0}]
  %s14 = inlined_call_operand.vmem [shape: f32[8,1], index: 14, kind: output, shape index: {1}]
  %15 = xla_tuple %s13, %s14
  %s16 = sld [smem:[#allocation0]]
  $region113: #{base_model_forward.1} parent=0
    _
  %s18 = ssub.s32 1, %s16
  %s19 = scalar_select 0, %s18, %s16
  $region1: #{base_model_forward.1} parent=0
    #allocation2 [shape = 'u8[2048]{0}', space=smem, size = 0x800, scoped, tag = 'input window, operand 0, single buffered']
    #allocation3 [shape = 's32[2]{0}', space=sflag, size = 0x8, scoped, tag = 'scoped memory for base_model_forward.1']
    #allocation4 [shape = 's32[2]{0}', space=sflag, size = 0x8, scoped, tag = 'scoped memory for base_model_forward.1']
    #allocation5 [shape = 'u8[131072]{0}', space=vmem, size = 0x20000, scoped, tag = 'input window, operand 6, single buffered']
    #allocation6 [shape = 'u8[262144]{0}', space=vmem, size = 0x40000, scoped, tag = 'input window, operand 8, single buffered']
    #allocation7 [shape = 's32[1]{0}', space=sflag, size = 0x4, scoped, tag = 'scoped memory for base_model_forward.1']
    #allocation8 [shape = 'u8[262144]{0}', space=vmem, size = 0x40000, scoped, tag = 'input window, operand 11, single buffered']
    %20 = vsyncpa [#allocation4], 0
    %21 = vsyncpa [#allocation3], 0
    %22 = vsyncpa [#allocation7], 0
    loop: start=0, step=1, limit=5
    $region2: #{base_model_forward.1} parent=1 // loop_pre_header
      _
    $region3: #{base_model_forward.1} parent=1 // loop_header
      %s24 = sphi 0, %s28
      %p25 = scmp.ge.s32.totalorder %s24, 5
      %s32 = sphi 0, %s32
      %s34 = sphi 0, %s32
      %s35 = sphi 0, %s34
      %s49 = sphi 0, %s35
      %s55 = sphi 0, %s57
      %s58 = sphi 0, %s55
      %s59 = sphi 0, %s58
      %s75 = sphi 0, %s59
      %s79 = sphi 0, %s79
      %s81 = sphi 0, %s79
      %s82 = sphi 0, %s81
      %s96 = sphi 0, %s82
      %s100 = sphi 0, %s100
      %s102 = sphi 0, %s100
      %s103 = sphi 0, %s102
      %s117 = sphi 0, %s103
      %s121 = sphi 0, %s121
      %s123 = sphi 0, %s121
      %s124 = sphi 0, %s123
      %s138 = sphi 0, %s124
      %s142 = sphi 0, %s142
      %s144 = sphi 0, %s142
      %s145 = sphi 0, %s144
      %s159 = sphi 0, %s145
      %s163 = sphi 0, %s163
      %s165 = sphi 0, %s163
      %s166 = sphi 0, %s165
      %s180 = sphi 0, %s166
      %s184 = sphi 0, %s184
      %s186 = sphi 0, %s184
      %s187 = sphi 0, %s186
      %s201 = sphi 0, %s187
      %s205 = sphi 0, %s205
      %s207 = sphi 0, %s205
      %s208 = sphi 0, %s207
      %s222 = sphi 0, %s208
      %s226 = sphi 0, %s226
      %s228 = sphi 0, %s226
      %s229 = sphi 0, %s228
      %s243 = sphi 0, %s229
      %s247 = sphi 0, %s247
      %s249 = sphi 0, %s247
      %s250 = sphi 0, %s249
      %s264 = sphi 0, %s250
      %s268 = sphi 0, %s268
      %s270 = sphi 0, %s268
      %s271 = sphi 0, %s270
      %s285 = sphi 0, %s271
      %s289 = sphi 0, %s289
      %s291 = sphi 0, %s289
      %s292 = sphi 0, %s291
      %s306 = sphi 0, %s292
      %s310 = sphi 0, %s310
      %s312 = sphi 0, %s310
      %s313 = sphi 0, %s312
      %s327 = sphi 0, %s313
      %s331 = sphi 0, %s331
      %s333 = sphi 0, %s331
      %s334 = sphi 0, %s333
      %s348 = sphi 0, %s334
    $region4: #{base_model_forward.1} parent=1 // loop_header_branch
      %27 = sbr.rel (%p25) target = $region8
    $region5: #{base_model_forward.1} parent=1 // loop_body
      %s29 = ssub.s32 %s24, 1
      %s30 = ssub.s32 %s24, 2
      %s31 = sadd.s32 %s24, 1
      %s33 = sadd.s32 %s32, 1
      %p36 = scmp.eq.s32.totalorder %s24, 2
      %p37 = scmp.ne.s32.totalorder %s32, %s34
      %p38 = scmp.eq.s32.totalorder %s24, 0
      %p39 = por %p37, %p38
      %p40 = scmp.ne.s32.totalorder %s32, %s34
      %p41 = scmp.eq.s32.totalorder %s29, 2
      %p42 = por %p40, %p41
      %p43 = scmp.ne.s32.totalorder %s34, %s35
      %p44 = scmp.eq.s32.totalorder %s29, 0
      %p45 = por %p43, %p44
      %p46 = scmp.ne.s32.totalorder %s34, %s35
      %p47 = scmp.eq.s32.totalorder %s30, 2
      %p48 = por %p46, %p47
      %p50 = scmp.ne.s32.totalorder %s35, %s49
      %p51 = scmp.eq.s32.totalorder %s30, 0
      %p52 = por %p50, %p51
      %s53 = ssub.s32 %s24, %s31
      %p54 = scmp.eq.s32.totalorder %s53, 0
      %s56 = sadd.s32 %s55, 1
      %s57 = scalar_select %p54, %s55, %s56
      %p60 = pneg %p54
      %p61 = scmp.eq.s32.totalorder %s24, 2
      %p62 = por %p60, %p61
      %p63 = scmp.ne.s32.totalorder %s55, %s58
      %p64 = scmp.eq.s32.totalorder %s24, 0
      %p65 = por %p63, %p64
      %p66 = scmp.ne.s32.totalorder %s55, %s58
      %p67 = scmp.eq.s32.totalorder %s29, 2
      %p68 = por %p66, %p67
      %p69 = scmp.ne.s32.totalorder %s58, %s59
      %p70 = scmp.eq.s32.totalorder %s29, 0
      %p71 = por %p69, %p70
      %p72 = scmp.ne.s32.totalorder %s58, %s59
      %p73 = scmp.eq.s32.totalorder %s30, 2
      %p74 = por %p72, %p73
      %p76 = scmp.ne.s32.totalorder %s59, %s75
      %p77 = scmp.eq.s32.totalorder %s30, 0
      %p78 = por %p76, %p77
      %s80 = sadd.s32 %s79, 1
      %p83 = scmp.eq.s32.totalorder %s24, 2
      %p84 = scmp.ne.s32.totalorder %s79, %s81
      %p85 = scmp.eq.s32.totalorder %s24, 0
      %p86 = por %p84, %p85
      %p87 = scmp.ne.s32.totalorder %s79, %s81
      %p88 = scmp.eq.s32.totalorder %s29, 2
      %p89 = por %p87, %p88
      %p90 = scmp.ne.s32.totalorder %s81, %s82
      %p91 = scmp.eq.s32.totalorder %s29, 0
      %p92 = por %p90, %p91
      %p93 = scmp.ne.s32.totalorder %s81, %s82
      %p94 = scmp.eq.s32.totalorder %s30, 2
      %p95 = por %p93, %p94
      %p97 = scmp.ne.s32.totalorder %s82, %s96
      %p98 = scmp.eq.s32.totalorder %s30, 0
      %p99 = por %p97, %p98
      %s101 = sadd.s32 %s100, 1
      %p104 = scmp.eq.s32.totalorder %s24, 2
      %p105 = scmp.ne.s32.totalorder %s100, %s102
      %p106 = scmp.eq.s32.totalorder %s24, 0
      %p107 = por %p105, %p106
      %p108 = scmp.ne.s32.totalorder %s100, %s102
      %p109 = scmp.eq.s32.totalorder %s29, 2
      %p110 = por %p108, %p109
      %p111 = scmp.ne.s32.totalorder %s102, %s103
      %p112 = scmp.eq.s32.totalorder %s29, 0
      %p113 = por %p111, %p112
      %p114 = scmp.ne.s32.totalorder %s102, %s103
      %p115 = scmp.eq.s32.totalorder %s30, 2
      %p116 = por %p114, %p115
      %p118 = scmp.ne.s32.totalorder %s103, %s117
      %p119 = scmp.eq.s32.totalorder %s30, 0
      %p120 = por %p118, %p119
      %s122 = sadd.s32 %s121, 1
      %p125 = scmp.eq.s32.totalorder %s24, 2
      %p126 = scmp.ne.s32.totalorder %s121, %s123
      %p127 = scmp.eq.s32.totalorder %s24, 0
      %p128 = por %p126, %p127
      %p129 = scmp.ne.s32.totalorder %s121, %s123
      %p130 = scmp.eq.s32.totalorder %s29, 2
      %p131 = por %p129, %p130
      %p132 = scmp.ne.s32.totalorder %s123, %s124
      %p133 = scmp.eq.s32.totalorder %s29, 0
      %p134 = por %p132, %p133
      %p135 = scmp.ne.s32.totalorder %s123, %s124
      %p136 = scmp.eq.s32.totalorder %s30, 2
      %p137 = por %p135, %p136
      %p139 = scmp.ne.s32.totalorder %s124, %s138
      %p140 = scmp.eq.s32.totalorder %s30, 0
      %p141 = por %p139, %p140
      %s143 = sadd.s32 %s142, 1
      %p146 = scmp.eq.s32.totalorder %s24, 2
      %p147 = scmp.ne.s32.totalorder %s142, %s144
      %p148 = scmp.eq.s32.totalorder %s24, 0
      %p149 = por %p147, %p148
      %p150 = scmp.ne.s32.totalorder %s142, %s144
      %p151 = scmp.eq.s32.totalorder %s29, 2
      %p152 = por %p150, %p151
      %p153 = scmp.ne.s32.totalorder %s144, %s145
      %p154 = scmp.eq.s32.totalorder %s29, 0
      %p155 = por %p153, %p154
      %p156 = scmp.ne.s32.totalorder %s144, %s145
      %p157 = scmp.eq.s32.totalorder %s30, 2
      %p158 = por %p156, %p157
      %p160 = scmp.ne.s32.totalorder %s145, %s159
      %p161 = scmp.eq.s32.totalorder %s30, 0
      %p162 = por %p160, %p161
      %s164 = sadd.s32 %s163, 1
      %p167 = scmp.eq.s32.totalorder %s24, 2
      %p168 = scmp.ne.s32.totalorder %s163, %s165
      %p169 = scmp.eq.s32.totalorder %s24, 0
      %p170 = por %p168, %p169
      %p171 = scmp.ne.s32.totalorder %s163, %s165
      %p172 = scmp.eq.s32.totalorder %s29, 2
      %p173 = por %p171, %p172
      %p174 = scmp.ne.s32.totalorder %s165, %s166
      %p175 = scmp.eq.s32.totalorder %s29, 0
      %p176 = por %p174, %p175
      %p177 = scmp.ne.s32.totalorder %s165, %s166
      %p178 = scmp.eq.s32.totalorder %s30, 2
      %p179 = por %p177, %p178
      %p181 = scmp.ne.s32.totalorder %s166, %s180
      %p182 = scmp.eq.s32.totalorder %s30, 0
      %p183 = por %p181, %p182
      %s185 = sadd.s32 %s184, 1
      %p188 = scmp.eq.s32.totalorder %s24, 2
      %p189 = scmp.ne.s32.totalorder %s184, %s186
      %p190 = scmp.eq.s32.totalorder %s24, 0
      %p191 = por %p189, %p190
      %p192 = scmp.ne.s32.totalorder %s184, %s186
      %p193 = scmp.eq.s32.totalorder %s29, 2
      %p194 = por %p192, %p193
      %p195 = scmp.ne.s32.totalorder %s186, %s187
      %p196 = scmp.eq.s32.totalorder %s29, 0
      %p197 = por %p195, %p196
      %p198 = scmp.ne.s32.totalorder %s186, %s187
      %p199 = scmp.eq.s32.totalorder %s30, 2
      %p200 = por %p198, %p199
      %p202 = scmp.ne.s32.totalorder %s187, %s201
      %p203 = scmp.eq.s32.totalorder %s30, 0
      %p204 = por %p202, %p203
      %s206 = sadd.s32 %s205, 1
      %p209 = scmp.eq.s32.totalorder %s24, 2
      %p210 = scmp.ne.s32.totalorder %s205, %s207
      %p211 = scmp.eq.s32.totalorder %s24, 0
      %p212 = por %p210, %p211
      %p213 = scmp.ne.s32.totalorder %s205, %s207
      %p214 = scmp.eq.s32.totalorder %s29, 2
      %p215 = por %p213, %p214
      %p216 = scmp.ne.s32.totalorder %s207, %s208
      %p217 = scmp.eq.s32.totalorder %s29, 0
      %p218 = por %p216, %p217
      %p219 = scmp.ne.s32.totalorder %s207, %s208
      %p220 = scmp.eq.s32.totalorder %s30, 2
      %p221 = por %p219, %p220
      %p223 = scmp.ne.s32.totalorder %s208, %s222
      %p224 = scmp.eq.s32.totalorder %s30, 0
      %p225 = por %p223, %p224
      %s227 = sadd.s32 %s226, 1
      %p230 = scmp.eq.s32.totalorder %s24, 2
      %p231 = scmp.ne.s32.totalorder %s226, %s228
      %p232 = scmp.eq.s32.totalorder %s24, 0
      %p233 = por %p231, %p232
      %p234 = scmp.ne.s32.totalorder %s226, %s228
      %p235 = scmp.eq.s32.totalorder %s29, 2
      %p236 = por %p234, %p235
      %p237 = scmp.ne.s32.totalorder %s228, %s229
      %p238 = scmp.eq.s32.totalorder %s29, 0
      %p239 = por %p237, %p238
      %p240 = scmp.ne.s32.totalorder %s228, %s229
      %p241 = scmp.eq.s32.totalorder %s30, 2
      %p242 = por %p240, %p241
      %p244 = scmp.ne.s32.totalorder %s229, %s243
      %p245 = scmp.eq.s32.totalorder %s30, 0
      %p246 = por %p244, %p245
      %s248 = sadd.s32 %s247, 1
      %p251 = scmp.eq.s32.totalorder %s24, 2
      %p252 = scmp.ne.s32.totalorder %s247, %s249
      %p253 = scmp.eq.s32.totalorder %s24, 0
      %p254 = por %p252, %p253
      %p255 = scmp.ne.s32.totalorder %s247, %s249
      %p256 = scmp.eq.s32.totalorder %s29, 2
      %p257 = por %p255, %p256
      %p258 = scmp.ne.s32.totalorder %s249, %s250
      %p259 = scmp.eq.s32.totalorder %s29, 0
      %p260 = por %p258, %p259
      %p261 = scmp.ne.s32.totalorder %s249, %s250
      %p262 = scmp.eq.s32.totalorder %s30, 2
      %p263 = por %p261, %p262
      %p265 = scmp.ne.s32.totalorder %s250, %s264
      %p266 = scmp.eq.s32.totalorder %s30, 0
      %p267 = por %p265, %p266
      %s269 = sadd.s32 %s268, 1
      %p272 = scmp.eq.s32.totalorder %s24, 2
      %p273 = scmp.ne.s32.totalorder %s268, %s270
      %p274 = scmp.eq.s32.totalorder %s24, 0
      %p275 = por %p273, %p274
      %p276 = scmp.ne.s32.totalorder %s268, %s270
      %p277 = scmp.eq.s32.totalorder %s29, 2
      %p278 = por %p276, %p277
      %p279 = scmp.ne.s32.totalorder %s270, %s271
      %p280 = scmp.eq.s32.totalorder %s29, 0
      %p281 = por %p279, %p280
      %p282 = scmp.ne.s32.totalorder %s270, %s271
      %p283 = scmp.eq.s32.totalorder %s30, 2
      %p284 = por %p282, %p283
      %p286 = scmp.ne.s32.totalorder %s271, %s285
      %p287 = scmp.eq.s32.totalorder %s30, 0
      %p288 = por %p286, %p287
      %s290 = sadd.s32 %s289, 1
      %p293 = scmp.eq.s32.totalorder %s24, 2
      %p294 = scmp.ne.s32.totalorder %s289, %s291
      %p295 = scmp.eq.s32.totalorder %s24, 0
      %p296 = por %p294, %p295
      %p297 = scmp.ne.s32.totalorder %s289, %s291
      %p298 = scmp.eq.s32.totalorder %s29, 2
      %p299 = por %p297, %p298
      %p300 = scmp.ne.s32.totalorder %s291, %s292
      %p301 = scmp.eq.s32.totalorder %s29, 0
      %p302 = por %p300, %p301
      %p303 = scmp.ne.s32.totalorder %s291, %s292
      %p304 = scmp.eq.s32.totalorder %s30, 2
      %p305 = por %p303, %p304
      %p307 = scmp.ne.s32.totalorder %s292, %s306
      %p308 = scmp.eq.s32.totalorder %s30, 0
      %p309 = por %p307, %p308
      %s311 = sadd.s32 %s310, 1
      %p314 = scmp.eq.s32.totalorder %s24, 2
      %p315 = scmp.ne.s32.totalorder %s310, %s312
      %p316 = scmp.eq.s32.totalorder %s24, 0
      %p317 = por %p315, %p316
      %p318 = scmp.ne.s32.totalorder %s310, %s312
      %p319 = scmp.eq.s32.totalorder %s29, 2
      %p320 = por %p318, %p319
      %p321 = scmp.ne.s32.totalorder %s312, %s313
      %p322 = scmp.eq.s32.totalorder %s29, 0
      %p323 = por %p321, %p322
      %p324 = scmp.ne.s32.totalorder %s312, %s313
      %p325 = scmp.eq.s32.totalorder %s30, 2
      %p326 = por %p324, %p325
      %p328 = scmp.ne.s32.totalorder %s313, %s327
      %p329 = scmp.eq.s32.totalorder %s30, 0
      %p330 = por %p328, %p329
      %s332 = sadd.s32 %s331, 1
      %p335 = scmp.eq.s32.totalorder %s24, 2
      %p336 = scmp.ne.s32.totalorder %s331, %s333
      %p337 = scmp.eq.s32.totalorder %s24, 0
      %p338 = por %p336, %p337
      %p339 = scmp.ne.s32.totalorder %s331, %s333
      %p340 = scmp.eq.s32.totalorder %s29, 2
      %p341 = por %p339, %p340
      %p342 = scmp.ne.s32.totalorder %s333, %s334
      %p343 = scmp.eq.s32.totalorder %s29, 0
      %p344 = por %p342, %p343
      %p345 = scmp.ne.s32.totalorder %s333, %s334
      %p346 = scmp.eq.s32.totalorder %s30, 2
      %p347 = por %p345, %p346
      %p349 = scmp.ne.s32.totalorder %s334, %s348
      %p350 = scmp.eq.s32.totalorder %s30, 0
      %p351 = por %p349, %p350
      %p352 = scmp.le.s32.totalorder 1, %s24
      %p353 = scmp.lt.s32.totalorder %s24, 4
      %p354 = pnand %p352, %p353
      %p355 = pneg %p354
      // Predicated region
      $region9: #{base_model_forward.1} parent=5 // pred_check
        _
      $region10: #{base_model_forward.1} parent=5 // pred_check_branch
        %357 = sbr.rel (%p354) target = $region12
      $region11: #{base_model_forward.1} parent=5 // pred_region
        %s358 = ssub.s32 %s24, 1
        // Predicated region
        $region13: #{base_model_forward.1} parent=11 // pred_check
          %p359 = pneg %p45
        $region14: #{base_model_forward.1} parent=11 // pred_check_branch
          %361 = sbr.rel (%p359) target = $region16
        $region15: #{base_model_forward.1} parent=11 // pred_region
          %s363 = ssub.s32 64, 64
          %364 = vsyncadd [#allocation4], %s363
          %s366 = sshll.u32 %s0, 4
          %s367 = int_to_ptr.vmem [resolvable:$true] %s366
          %369 = dma.vmem_to_smem %s367, 64, [#allocation2], [#allocation4]
        $region16: #{base_model_forward.1} parent=11 // pred_fallthru
          _
        // Predicated region
        $region17: #{base_model_forward.1} parent=11 // pred_check
          %p370 = pneg %p92
        $region18: #{base_model_forward.1} parent=11 // pred_check_branch
          %372 = sbr.rel (%p370) target = $region20
        $region19: #{base_model_forward.1} parent=11 // pred_region
          _
        $region20: #{base_model_forward.1} parent=11 // pred_fallthru
          _
        // Predicated region
        $region21: #{base_model_forward.1} parent=11 // pred_check
          %p373 = pneg %p113
        $region22: #{base_model_forward.1} parent=11 // pred_check_branch
          %375 = sbr.rel (%p373) target = $region24
        $region23: #{base_model_forward.1} parent=11 // pred_region
          _
        $region24: #{base_model_forward.1} parent=11 // pred_fallthru
          _
        // Predicated region
        $region25: #{base_model_forward.1} parent=11 // pred_check
          %p376 = pneg %p134
        $region26: #{base_model_forward.1} parent=11 // pred_check_branch
          %378 = sbr.rel (%p376) target = $region28
        $region27: #{base_model_forward.1} parent=11 // pred_region
          _
        $region28: #{base_model_forward.1} parent=11 // pred_fallthru
          _
        // Predicated region
        $region29: #{base_model_forward.1} parent=11 // pred_check
          %p379 = pneg %p155
        $region30: #{base_model_forward.1} parent=11 // pred_check_branch
          %381 = sbr.rel (%p379) target = $region32
        $region31: #{base_model_forward.1} parent=11 // pred_region
          _
        $region32: #{base_model_forward.1} parent=11 // pred_fallthru
          _
        // Predicated region
        $region33: #{base_model_forward.1} parent=11 // pred_check
          %p382 = pneg %p176
        $region34: #{base_model_forward.1} parent=11 // pred_check_branch
          %384 = sbr.rel (%p382) target = $region36
        $region35: #{base_model_forward.1} parent=11 // pred_region
          %s386 = ssub.s32 4096, 4096
          %387 = vsyncadd [#allocation3], %s386
          %s388 = sshll.u32 [#allocation5], 4
          %s389 = int_to_ptr.vmem [resolvable:$true] %s388
          %394 = dma.hbm_to_vmem [thread:$0]  %s6, 4096, %s389, [#allocation3], 256, 256, 16
        $region36: #{base_model_forward.1} parent=11 // pred_fallthru
          _
        // Predicated region
        $region37: #{base_model_forward.1} parent=11 // pred_check
          %p395 = pneg %p197
        $region38: #{base_model_forward.1} parent=11 // pred_check_branch
          %397 = sbr.rel (%p395) target = $region40
        $region39: #{base_model_forward.1} parent=11 // pred_region
          _
        $region40: #{base_model_forward.1} parent=11 // pred_fallthru
          _
        // Predicated region
        $region41: #{base_model_forward.1} parent=11 // pred_check
          %p398 = pneg %p218
        $region42: #{base_model_forward.1} parent=11 // pred_check_branch
          %400 = sbr.rel (%p398) target = $region44
        $region43: #{base_model_forward.1} parent=11 // pred_region
          %s402 = ssub.s32 8192, 8192
          %403 = vsyncadd [#allocation7], %s402
          %s404 = sshll.u32 [#allocation6], 4
          %s405 = int_to_ptr.vmem [resolvable:$true] %s404
          %410 = dma.hbm_to_vmem [thread:$0]  %s8, 8192, %s405, [#allocation7], 256, 256, 16
        $region44: #{base_model_forward.1} parent=11 // pred_fallthru
          _
        // Predicated region
        $region45: #{base_model_forward.1} parent=11 // pred_check
          %p411 = pneg %p239
        $region46: #{base_model_forward.1} parent=11 // pred_check_branch
          %413 = sbr.rel (%p411) target = $region48
        $region47: #{base_model_forward.1} parent=11 // pred_region
          _
        $region48: #{base_model_forward.1} parent=11 // pred_fallthru
          _
        // Predicated region
        $region49: #{base_model_forward.1} parent=11 // pred_check
          %p414 = pneg %p260
        $region50: #{base_model_forward.1} parent=11 // pred_check_branch
          %416 = sbr.rel (%p414) target = $region52
        $region51: #{base_model_forward.1} parent=11 // pred_region
          _
        $region52: #{base_model_forward.1} parent=11 // pred_fallthru
          _
        // Predicated region
        $region53: #{base_model_forward.1} parent=11 // pred_check
          %p417 = pneg %p281
        $region54: #{base_model_forward.1} parent=11 // pred_check_branch
          %419 = sbr.rel (%p417) target = $region56
        $region55: #{base_model_forward.1} parent=11 // pred_region
          %s421 = ssub.s32 8192, 8192
          %422 = vsyncadd [#allocation7], %s421
          %s423 = sshll.u32 [#allocation8], 4
          %s424 = int_to_ptr.vmem [resolvable:$true] %s423
          %429 = dma.hbm_to_vmem [thread:$0]  %s11, 8192, %s424, [#allocation7], 256, 256, 16
        $region56: #{base_model_forward.1} parent=11 // pred_fallthru
          _
        // Predicated region
        $region57: #{base_model_forward.1} parent=11 // pred_check
          %p430 = pneg %p302
        $region58: #{base_model_forward.1} parent=11 // pred_check_branch
          %432 = sbr.rel (%p430) target = $region60
        $region59: #{base_model_forward.1} parent=11 // pred_region
          _
        $region60: #{base_model_forward.1} parent=11 // pred_fallthru
          _
      $region12: #{base_model_forward.1} parent=5 // pred_fallthru
        _
      %p433 = scmp.lt.s32.totalorder %s24, 3
      // Predicated region
      $region61: #{base_model_forward.1} parent=5 // pred_check
        %p434 = pneg %p433
      $region62: #{base_model_forward.1} parent=5 // pred_check_branch
        %436 = sbr.rel (%p434) target = $region64
      $region63: #{base_model_forward.1} parent=5 // pred_region
        // Predicated region
        $region65: #{base_model_forward.1} parent=63 // pred_check
          %p437 = pneg %p65
        $region66: #{base_model_forward.1} parent=63 // pred_check_branch
          %439 = sbr.rel (%p437) target = $region68
        $region67: #{base_model_forward.1} parent=63 // pred_region
          %p440 = scmp.lt.s32.totalorder %s24, 2
          %s441 = scalar_select %p440, %s24, 2
          %s442 = smul.addr %s441, 2
          %s443 = smul.addr %s442, 8
          %s444 = scalar_lea.vmem %s1, %s443
        $region68: #{base_model_forward.1} parent=63 // pred_fallthru
          _
      $region64: #{base_model_forward.1} parent=5 // pred_fallthru
        _
      %p445 = scmp.le.s32.totalorder 1, %s24
      %p446 = scmp.lt.s32.totalorder %s24, 4
      %p447 = pnand %p445, %p446
      %p448 = pneg %p447
      // Predicated region
      $region69: #{base_model_forward.1} parent=5 // pred_check
        _
      $region70: #{base_model_forward.1} parent=5 // pred_check_branch
        %450 = sbr.rel (%p447) target = $region72
      $region71: #{base_model_forward.1} parent=5 // pred_region
        %s451 = ssub.s32 %s24, 1
        // Predicated region
        $region73: #{base_model_forward.1} parent=71 // pred_check
          %p452 = pneg %p45
        $region74: #{base_model_forward.1} parent=71 // pred_check_branch
          %454 = sbr.rel (%p452) target = $region76
        $region75: #{base_model_forward.1} parent=71 // pred_region
          %455 = dma.done [#allocation4], 64
        $region76: #{base_model_forward.1} parent=71 // pred_fallthru
          _
        // Predicated region
        $region77: #{base_model_forward.1} parent=71 // pred_check
          %p456 = pneg %p176
        $region78: #{base_model_forward.1} parent=71 // pred_check_branch
          %458 = sbr.rel (%p456) target = $region80
        $region79: #{base_model_forward.1} parent=71 // pred_region
          %459 = dma.done [#allocation3], 4096
        $region80: #{base_model_forward.1} parent=71 // pred_fallthru
          _
        // Predicated region
        $region81: #{base_model_forward.1} parent=71 // pred_check
          %p460 = pneg %p218
        $region82: #{base_model_forward.1} parent=71 // pred_check_branch
          %462 = sbr.rel (%p460) target = $region84
        $region83: #{base_model_forward.1} parent=71 // pred_region
          %463 = dma.done [#allocation7], 8192
        $region84: #{base_model_forward.1} parent=71 // pred_fallthru
          _
        // Predicated region
        $region85: #{base_model_forward.1} parent=71 // pred_check
          %p464 = pneg %p281
        $region86: #{base_model_forward.1} parent=71 // pred_check_branch
          %466 = sbr.rel (%p464) target = $region88
        $region87: #{base_model_forward.1} parent=71 // pred_region
          %467 = dma.done [#allocation7], 8192
        $region88: #{base_model_forward.1} parent=71 // pred_fallthru
          _
        %468 = sfence
        %p469 = pneg %p45
        %p470 = pneg %p42
        %p471 = scmp.lt.s32.totalorder %s29, 2
        %s472 = scalar_select %p471, %s29, 2
        %s473 = smul.addr %s472, 2
        %s474 = smul.addr %s473, 8
        %s475 = scalar_lea.vmem %s1, %s474
        %p476 = pneg %p71
        %p477 = pneg %p68
        %p478 = pneg %p92
        %p479 = pneg %p89
        %p480 = pneg %p113
        %p481 = pneg %p110
        %p482 = pneg %p134
        %p483 = pneg %p131
        %p484 = pneg %p155
        %p485 = pneg %p152
        %p486 = pneg %p176
        %p487 = pneg %p173
        %p488 = pneg %p197
        %p489 = pneg %p194
        %p490 = pneg %p218
        %p491 = pneg %p215
        %p492 = pneg %p239
        %p493 = pneg %p236
        %p494 = pneg %p260
        %p495 = pneg %p257
        %p496 = pneg %p281
        %p497 = pneg %p278
        %p498 = pneg %p302
        %p499 = pneg %p299
        %p500 = pneg %p323
        %p501 = pneg %p320
        %p502 = pneg %p344
        %p503 = pneg %p341
        %p504 = scmp.lt.s32.totalorder %s29, 2
        %s505 = scalar_select %p504, %s29, 2
        %s506 = smul.addr %s505, 2
        %s507 = smul.addr %s506, 8
        %s508 = scalar_lea.vmem %s1, %s507
        %p509 = scmp.eq.s32.totalorder %s29, 0
        // Predicated region
        $region89: #{base_model_forward.1} parent=71 // pred_check
          %p510 = pneg %p509
        $region90: #{base_model_forward.1} parent=71 // pred_check_branch
          %512 = sbr.rel (%p510) target = $region92
        $region91: #{base_model_forward.1} parent=71 // pred_region
          %v513 = vld [vmem:[%s2] sm:$0xff]
          %v514 = vld [vmem:[%s2 + $0x8] sm:$0xff]
          %515 = vst [vmem:[%s13] sm:$0xff] %v513
          %516 = vst [vmem:[%s13 + $0x8] sm:$0xff] %v514
          %vm517 = vcmask 7168
          %518 = vst.msk [vmem:[%s14] sm:$0xff] %vm517, 0.0
        $region92: #{base_model_forward.1} parent=71 // pred_fallthru
          _
        %s519 = smul.u32 %s29, 128
        %s520 = sld [smem:[#allocation2 + %s519]]
        %s521 = sadd.s32 %s519, 1
        %s522 = sld [smem:[#allocation2 + %s521]]
        %s523 = sadd.s32 %s519, 2
        %s524 = sld [smem:[#allocation2 + %s523]]
        %s525 = sadd.s32 %s519, 3
        %s526 = sld [smem:[#allocation2 + %s525]]
        %s527 = sadd.s32 %s519, 4
        %s528 = sld [smem:[#allocation2 + %s527]]
        %s529 = sadd.s32 %s519, 5
        %s530 = sld [smem:[#allocation2 + %s529]]
        %v531 = vld [vmem:[%s13] sm:$0xff]
        %v532 = vld [vmem:[%s13 + $0x8] sm:$0xff]
        %v533 = vld [vmem:[%s508] sm:$0xff]
        %v534 = vld [vmem:[%s508 + $0x8] sm:$0xff]
        %v535 = vld [vmem:[%s3] sm:$0xff]
        %v536 = vld [vmem:[%s3 + $0x8] sm:$0xff]
        %v537 = vld [vmem:[%s3 + $0x10] sm:$0xff]
        %v538 = vld [vmem:[%s3 + $0x18] sm:$0xff]
        %v539 = vld [vmem:[%s3 + $0x20] sm:$0xff]
        %v540 = vld [vmem:[%s3 + $0x28] sm:$0xff]
        %v541 = vld [vmem:[%s3 + $0x30] sm:$0xff]
        %v542 = vld [vmem:[%s3 + $0x38] sm:$0xff]
        %v543 = vld [vmem:[%s3 + $0x40] sm:$0xff]
        %v544 = vld [vmem:[%s3 + $0x48] sm:$0xff]
        %v545 = vld [vmem:[%s3 + $0x50] sm:$0xff]
        %v546 = vld [vmem:[%s3 + $0x58] sm:$0xff]
        %v547 = vld [vmem:[%s3 + $0x60] sm:$0xff]
        %v548 = vld [vmem:[%s3 + $0x68] sm:$0xff]
        %v549 = vld [vmem:[%s3 + $0x70] sm:$0xff]
        %v550 = vld [vmem:[%s3 + $0x78] sm:$0xff]
        %v551 = vld [vmem:[%s3 + $0x80] sm:$0xff]
        %v552 = vld [vmem:[%s3 + $0x88] sm:$0xff]
        %v553 = vld [vmem:[%s3 + $0x90] sm:$0xff]
        %v554 = vld [vmem:[%s3 + $0x98] sm:$0xff]
        %v555 = vld [vmem:[%s3 + $0xa0] sm:$0xff]
        %v556 = vld [vmem:[%s3 + $0xa8] sm:$0xff]
        %v557 = vld [vmem:[%s3 + $0xb0] sm:$0xff]
        %v558 = vld [vmem:[%s3 + $0xb8] sm:$0xff]
        %v559 = vld [vmem:[%s3 + $0xc0] sm:$0xff]
        %v560 = vld [vmem:[%s3 + $0xc8] sm:$0xff]
        %v561 = vld [vmem:[%s3 + $0xd0] sm:$0xff]
        %v562 = vld [vmem:[%s3 + $0xd8] sm:$0xff]
        %v563 = vld [vmem:[%s3 + $0xe0] sm:$0xff]
        %v564 = vld [vmem:[%s3 + $0xe8] sm:$0xff]
        %v565 = vld [vmem:[%s3 + $0xf0] sm:$0xff]
        %v566 = vld [vmem:[%s3 + $0xf8] sm:$0xff]
        %v567 = vld [vmem:[%s4] sm:$0x1]
        %v569 = vlaneseq
        %v570 = vshrl.u32 %v569, 7
        %v571 = vsub.s32 0, %v570
        %v572 = vrot.slane %v567, %v571
        %574 = vmatprep.subr.mxu0 0.0
        %575 = vmatpush1.msra.mxu0 %v550
        %576 = vmatprep.subr.mxu0 0.0
        %577 = vmatpush1.msra.mxu0 %v549
        %578 = vmatprep.subr.mxu0 0.0
        %579 = vmatpush1.msra.mxu0 %v548
        %580 = vmatprep.subr.mxu0 0.0
        %581 = vmatpush1.msra.mxu0 %v547
        %582 = vmatprep.subr.mxu0 0.0
        %583 = vmatpush1.msra.mxu0 %v546
        %584 = vmatprep.subr.mxu0 0.0
        %585 = vmatpush1.msra.mxu0 %v545
        %586 = vmatprep.subr.mxu0 0.0
        %587 = vmatpush1.msra.mxu0 %v544
        %588 = vmatprep.subr.mxu0 0.0
        %589 = vmatpush1.msra.mxu0 %v543
        %590 = vmatprep.subr.mxu0 0.0
        %591 = vmatpush1.msra.mxu0 %v542
        %592 = vmatprep.subr.mxu0 0.0
        %593 = vmatpush1.msra.mxu0 %v541
        %594 = vmatprep.subr.mxu0 0.0
        %595 = vmatpush1.msra.mxu0 %v540
        %596 = vmatprep.subr.mxu0 0.0
        %597 = vmatpush1.msra.mxu0 %v539
        %598 = vmatprep.subr.mxu0 0.0
        %599 = vmatpush1.msra.mxu0 %v538
        %600 = vmatprep.subr.mxu0 0.0
        %601 = vmatpush1.msra.mxu0 %v537
        %602 = vmatprep.subr.mxu0 0.0
        %603 = vmatpush1.msra.mxu0 %v536
        %604 = vmatprep.subr.mxu0 0.0
        %605 = vmatpush1.msra.mxu0 %v535
        %606 = vmatprep.subr.mxu0 0.0
        %607 = vmatpush2.msra.mxu0 %v566
        %608 = vmatprep.subr.mxu0 0.0
        %609 = vmatpush2.msra.mxu0 %v565
        %610 = vmatprep.subr.mxu0 0.0
        %611 = vmatpush2.msra.mxu0 %v564
        %612 = vmatprep.subr.mxu0 0.0
        %613 = vmatpush2.msra.mxu0 %v563
        %614 = vmatprep.subr.mxu0 0.0
        %615 = vmatpush2.msra.mxu0 %v562
        %616 = vmatprep.subr.mxu0 0.0
        %617 = vmatpush2.msra.mxu0 %v561
        %618 = vmatprep.subr.mxu0 0.0
        %619 = vmatpush2.msra.mxu0 %v560
        %620 = vmatprep.subr.mxu0 0.0
        %621 = vmatpush2.msra.mxu0 %v559
        %622 = vmatprep.subr.mxu0 0.0
        %623 = vmatpush2.msra.mxu0 %v558
        %624 = vmatprep.subr.mxu0 0.0
        %625 = vmatpush2.msra.mxu0 %v557
        %626 = vmatprep.subr.mxu0 0.0
        %627 = vmatpush2.msra.mxu0 %v556
        %628 = vmatprep.subr.mxu0 0.0
        %629 = vmatpush2.msra.mxu0 %v555
        %630 = vmatprep.subr.mxu0 0.0
        %631 = vmatpush2.msra.mxu0 %v554
        %632 = vmatprep.subr.mxu0 0.0
        %633 = vmatpush2.msra.mxu0 %v553
        %634 = vmatprep.subr.mxu0 0.0
        %635 = vmatpush2.msra.mxu0 %v552
        %636 = vmatprep.subr.mxu0 0.0
        %637 = vmatpush2.msra.mxu0 %v551
        %638 = vmatprep.mubr.f32.mxu0 %v532
        %639 = vmatmul.mubr.f32.gmra.mxu0 %v531
        %v640 = vpop.f32.mrf.mxu0
        %v641 = vadd.f32 %v572, %v640
        %v642 = vpop.f32.mrf.mxu0
        %643 = vdwg.mxu0
        %v644 = vld [vmem:[%s5] sm:$0x1]
        %v645 = vstv %s522
        %v646 = vmul.f32 %v645, %v644
        %v648 = vlaneseq
        %v649 = vshrl.u32 %v648, 7
        %v650 = vsub.s32 0, %v649
        %v651 = vrot.slane %v646, %v650
        %v653 = vadd.f32 %v641, %v651
        %v654 = vtanh.pop %v653
        %v655 = vld [vmem:[#allocation5] sm:$0xff]
        %v656 = vld [vmem:[#allocation5 + $0x8] sm:$0xff]
        %v657 = vld [vmem:[#allocation5 + $0x10] sm:$0xff]
        %v658 = vld [vmem:[#allocation5 + $0x18] sm:$0xff]
        %v659 = vld [vmem:[#allocation5 + $0x20] sm:$0xff]
        %v660 = vld [vmem:[#allocation5 + $0x28] sm:$0xff]
        %v661 = vld [vmem:[#allocation5 + $0x30] sm:$0xff]
        %v662 = vld [vmem:[#allocation5 + $0x38] sm:$0xff]
        %v663 = vld [vmem:[#allocation5 + $0x40] sm:$0xff]
        %v664 = vld [vmem:[#allocation5 + $0x48] sm:$0xff]
        %v665 = vld [vmem:[#allocation5 + $0x50] sm:$0xff]
        %v666 = vld [vmem:[#allocation5 + $0x58] sm:$0xff]
        %v667 = vld [vmem:[#allocation5 + $0x60] sm:$0xff]
        %v668 = vld [vmem:[#allocation5 + $0x68] sm:$0xff]
        %v669 = vld [vmem:[#allocation5 + $0x70] sm:$0xff]
        %v670 = vld [vmem:[#allocation5 + $0x78] sm:$0xff]
        %v671 = vld [vmem:[#allocation5 + $0x80] sm:$0xff]
        %v672 = vld [vmem:[#allocation5 + $0x88] sm:$0xff]
        %v673 = vld [vmem:[#allocation5 + $0x90] sm:$0xff]
        %v674 = vld [vmem:[#allocation5 + $0x98] sm:$0xff]
        %v675 = vld [vmem:[#allocation5 + $0xa0] sm:$0xff]
        %v676 = vld [vmem:[#allocation5 + $0xa8] sm:$0xff]
        %v677 = vld [vmem:[#allocation5 + $0xb0] sm:$0xff]
        %v678 = vld [vmem:[#allocation5 + $0xb8] sm:$0xff]
        %v679 = vld [vmem:[#allocation5 + $0xc0] sm:$0xff]
        %v680 = vld [vmem:[#allocation5 + $0xc8] sm:$0xff]
        %v681 = vld [vmem:[#allocation5 + $0xd0] sm:$0xff]
        %v682 = vld [vmem:[#allocation5 + $0xd8] sm:$0xff]
        %v683 = vld [vmem:[#allocation5 + $0xe0] sm:$0xff]
        %v684 = vld [vmem:[#allocation5 + $0xe8] sm:$0xff]
        %v685 = vld [vmem:[#allocation5 + $0xf0] sm:$0xff]
        %v686 = vld [vmem:[#allocation5 + $0xf8] sm:$0xff]
        %v687 = vld [vmem:[%s7] sm:$0x3]
        %v689 = vlaneseq
        %v690 = vshrl.u32 %v689, 7
        %v691 = vsub.s32 0, %v690
        %v692 = vrot.slane %v687, %v691
        %v693 = vlaneseq
        %v694 = vshrl.u32 %v693, 7
        %v695 = vsub.s32 1, %v694
        %v696 = vrot.slane %v687, %v695
        %699 = vmatprep.subr.mxu0 %v686
        %700 = vmatpush1.msra.mxu0 %v685
        %701 = vmatprep.subr.mxu0 %v684
        %702 = vmatpush1.msra.mxu0 %v683
        %703 = vmatprep.subr.mxu0 %v682
        %704 = vmatpush1.msra.mxu0 %v681
        %705 = vmatprep.subr.mxu0 %v680
        %706 = vmatpush1.msra.mxu0 %v679
        %707 = vmatprep.subr.mxu0 %v678
        %708 = vmatpush1.msra.mxu0 %v677
        %709 = vmatprep.subr.mxu0 %v676
        %710 = vmatpush1.msra.mxu0 %v675
        %711 = vmatprep.subr.mxu0 %v674
        %712 = vmatpush1.msra.mxu0 %v673
        %713 = vmatprep.subr.mxu0 %v672
        %714 = vmatpush1.msra.mxu0 %v671
        %715 = vmatprep.subr.mxu0 %v670
        %716 = vmatpush1.msra.mxu0 %v669
        %717 = vmatprep.subr.mxu0 %v668
        %718 = vmatpush1.msra.mxu0 %v667
        %719 = vmatprep.subr.mxu0 %v666
        %720 = vmatpush1.msra.mxu0 %v665
        %721 = vmatprep.subr.mxu0 %v664
        %722 = vmatpush1.msra.mxu0 %v663
        %723 = vmatprep.subr.mxu0 %v662
        %724 = vmatpush1.msra.mxu0 %v661
        %725 = vmatprep.subr.mxu0 %v660
        %726 = vmatpush1.msra.mxu0 %v659
        %727 = vmatprep.subr.mxu0 %v658
        %728 = vmatpush1.msra.mxu0 %v657
        %729 = vmatprep.subr.mxu0 %v656
        %730 = vmatpush1.msra.mxu0 %v655
        %731 = vmatprep.subr.mxu0 0.0
        %732 = vmatpush2.msra.mxu0 0.0
        %733 = vmatprep.subr.mxu0 0.0
        %734 = vmatpush2.msra.mxu0 0.0
        %735 = vmatprep.subr.mxu0 0.0
        %736 = vmatpush2.msra.mxu0 0.0
        %737 = vmatprep.subr.mxu0 0.0
        %738 = vmatpush2.msra.mxu0 0.0
        %739 = vmatprep.subr.mxu0 0.0
        %740 = vmatpush2.msra.mxu0 0.0
        %741 = vmatprep.subr.mxu0 0.0
        %742 = vmatpush2.msra.mxu0 0.0
        %743 = vmatprep.subr.mxu0 0.0
        %744 = vmatpush2.msra.mxu0 0.0
        %745 = vmatprep.subr.mxu0 0.0
        %746 = vmatpush2.msra.mxu0 0.0
        %747 = vmatprep.subr.mxu0 0.0
        %748 = vmatpush2.msra.mxu0 0.0
        %749 = vmatprep.subr.mxu0 0.0
        %750 = vmatpush2.msra.mxu0 0.0
        %751 = vmatprep.subr.mxu0 0.0
        %752 = vmatpush2.msra.mxu0 0.0
        %753 = vmatprep.subr.mxu0 0.0
        %754 = vmatpush2.msra.mxu0 0.0
        %755 = vmatprep.subr.mxu0 0.0
        %756 = vmatpush2.msra.mxu0 0.0
        %757 = vmatprep.subr.mxu0 0.0
        %758 = vmatpush2.msra.mxu0 0.0
        %759 = vmatprep.subr.mxu0 0.0
        %760 = vmatpush2.msra.mxu0 0.0
        %761 = vmatprep.subr.mxu0 0.0
        %762 = vmatpush2.msra.mxu0 0.0
        %763 = vmatprep.mubr.f32.mxu0 0.0
        %764 = vmatmul.mubr.f32.gmra.mxu0 %v654
        %v765 = vpop.f32.mrf.mxu0
        %v766 = vadd.f32 %v692, %v765
        %v767 = vpop.f32.mrf.mxu0
        %v768 = vadd.f32 %v696, %v767
        %769 = vdwg.mxu0
        %v770 = vstv %s520
        %v771 = vmul.f32 %v766, %v770
        %v772 = vmul.f32 %v768, %v770
        %v773 = vadd.f32 %v531, %v771
        %v774 = vadd.f32 %v532, %v772
        %v775 = vstv %s526
        %v776 = vmul.f32 %v775, %v533
        %v777 = vmul.f32 %v775, %v534
        %v778 = vadd.f32 %v773, %v776
        %v779 = vadd.f32 %v774, %v777
        %v780 = vld [vmem:[#allocation6] sm:$0xff]
        %v781 = vld [vmem:[#allocation6 + $0x8] sm:$0xff]
        %v782 = vld [vmem:[#allocation6 + $0x10] sm:$0xff]
        %v783 = vld [vmem:[#allocation6 + $0x18] sm:$0xff]
        %v784 = vld [vmem:[#allocation6 + $0x20] sm:$0xff]
        %v785 = vld [vmem:[#allocation6 + $0x28] sm:$0xff]
        %v786 = vld [vmem:[#allocation6 + $0x30] sm:$0xff]
        %v787 = vld [vmem:[#allocation6 + $0x38] sm:$0xff]
        %v788 = vld [vmem:[#allocation6 + $0x40] sm:$0xff]
        %v789 = vld [vmem:[#allocation6 + $0x48] sm:$0xff]
        %v790 = vld [vmem:[#allocation6 + $0x50] sm:$0xff]
        %v791 = vld [vmem:[#allocation6 + $0x58] sm:$0xff]
        %v792 = vld [vmem:[#allocation6 + $0x60] sm:$0xff]
        %v793 = vld [vmem:[#allocation6 + $0x68] sm:$0xff]
        %v794 = vld [vmem:[#allocation6 + $0x70] sm:$0xff]
        %v795 = vld [vmem:[#allocation6 + $0x78] sm:$0xff]
        %v796 = vld [vmem:[#allocation6 + $0x80] sm:$0xff]
        %v797 = vld [vmem:[#allocation6 + $0x88] sm:$0xff]
        %v798 = vld [vmem:[#allocation6 + $0x90] sm:$0xff]
        %v799 = vld [vmem:[#allocation6 + $0x98] sm:$0xff]
        %v800 = vld [vmem:[#allocation6 + $0xa0] sm:$0xff]
        %v801 = vld [vmem:[#allocation6 + $0xa8] sm:$0xff]
        %v802 = vld [vmem:[#allocation6 + $0xb0] sm:$0xff]
        %v803 = vld [vmem:[#allocation6 + $0xb8] sm:$0xff]
        %v804 = vld [vmem:[#allocation6 + $0xc0] sm:$0xff]
        %v805 = vld [vmem:[#allocation6 + $0xc8] sm:$0xff]
        %v806 = vld [vmem:[#allocation6 + $0xd0] sm:$0xff]
        %v807 = vld [vmem:[#allocation6 + $0xd8] sm:$0xff]
        %v808 = vld [vmem:[#allocation6 + $0xe0] sm:$0xff]
        %v809 = vld [vmem:[#allocation6 + $0xe8] sm:$0xff]
        %v810 = vld [vmem:[#allocation6 + $0xf0] sm:$0xff]
        %v811 = vld [vmem:[#allocation6 + $0xf8] sm:$0xff]
        %v812 = vld [vmem:[#allocation6 + $0x100] sm:$0xff]
        %v813 = vld [vmem:[#allocation6 + $0x108] sm:$0xff]
        %v814 = vld [vmem:[#allocation6 + $0x110] sm:$0xff]
        %v815 = vld [vmem:[#allocation6 + $0x118] sm:$0xff]
        %v816 = vld [vmem:[#allocation6 + $0x120] sm:$0xff]
        %v817 = vld [vmem:[#allocation6 + $0x128] sm:$0xff]
        %v818 = vld [vmem:[#allocation6 + $0x130] sm:$0xff]
        %v819 = vld [vmem:[#allocation6 + $0x138] sm:$0xff]
        %v820 = vld [vmem:[#allocation6 + $0x140] sm:$0xff]
        %v821 = vld [vmem:[#allocation6 + $0x148] sm:$0xff]
        %v822 = vld [vmem:[#allocation6 + $0x150] sm:$0xff]
        %v823 = vld [vmem:[#allocation6 + $0x158] sm:$0xff]
        %v824 = vld [vmem:[#allocation6 + $0x160] sm:$0xff]
        %v825 = vld [vmem:[#allocation6 + $0x168] sm:$0xff]
        %v826 = vld [vmem:[#allocation6 + $0x170] sm:$0xff]
        %v827 = vld [vmem:[#allocation6 + $0x178] sm:$0xff]
        %v828 = vld [vmem:[#allocation6 + $0x180] sm:$0xff]
        %v829 = vld [vmem:[#allocation6 + $0x188] sm:$0xff]
        %v830 = vld [vmem:[#allocation6 + $0x190] sm:$0xff]
        %v831 = vld [vmem:[#allocation6 + $0x198] sm:$0xff]
        %v832 = vld [vmem:[#allocation6 + $0x1a0] sm:$0xff]
        %v833 = vld [vmem:[#allocation6 + $0x1a8] sm:$0xff]
        %v834 = vld [vmem:[#allocation6 + $0x1b0] sm:$0xff]
        %v835 = vld [vmem:[#allocation6 + $0x1b8] sm:$0xff]
        %v836 = vld [vmem:[#allocation6 + $0x1c0] sm:$0xff]
        %v837 = vld [vmem:[#allocation6 + $0x1c8] sm:$0xff]
        %v838 = vld [vmem:[#allocation6 + $0x1d0] sm:$0xff]
        %v839 = vld [vmem:[#allocation6 + $0x1d8] sm:$0xff]
        %v840 = vld [vmem:[#allocation6 + $0x1e0] sm:$0xff]
        %v841 = vld [vmem:[#allocation6 + $0x1e8] sm:$0xff]
        %v842 = vld [vmem:[#allocation6 + $0x1f0] sm:$0xff]
        %v843 = vld [vmem:[#allocation6 + $0x1f8] sm:$0xff]
        %v844 = vld [vmem:[%s9] sm:$0x3]
        %v846 = vlaneseq
        %v847 = vshrl.u32 %v846, 7
        %v848 = vsub.s32 0, %v847
        %v849 = vrot.slane %v844, %v848
        %v850 = vlaneseq
        %v851 = vshrl.u32 %v850, 7
        %v852 = vsub.s32 1, %v851
        %v853 = vrot.slane %v844, %v852
        %856 = vmatprep.subr.mxu0 %v811
        %857 = vmatpush1.msra.mxu0 %v810
        %858 = vmatprep.subr.mxu0 %v809
        %859 = vmatpush1.msra.mxu0 %v808
        %860 = vmatprep.subr.mxu0 %v807
        %861 = vmatpush1.msra.mxu0 %v806
        %862 = vmatprep.subr.mxu0 %v805
        %863 = vmatpush1.msra.mxu0 %v804
        %864 = vmatprep.subr.mxu0 %v803
        %865 = vmatpush1.msra.mxu0 %v802
        %866 = vmatprep.subr.mxu0 %v801
        %867 = vmatpush1.msra.mxu0 %v800
        %868 = vmatprep.subr.mxu0 %v799
        %869 = vmatpush1.msra.mxu0 %v798
        %870 = vmatprep.subr.mxu0 %v797
        %871 = vmatpush1.msra.mxu0 %v796
        %872 = vmatprep.subr.mxu0 %v795
        %873 = vmatpush1.msra.mxu0 %v794
        %874 = vmatprep.subr.mxu0 %v793
        %875 = vmatpush1.msra.mxu0 %v792
        %876 = vmatprep.subr.mxu0 %v791
        %877 = vmatpush1.msra.mxu0 %v790
        %878 = vmatprep.subr.mxu0 %v789
        %879 = vmatpush1.msra.mxu0 %v788
        %880 = vmatprep.subr.mxu0 %v787
        %881 = vmatpush1.msra.mxu0 %v786
        %882 = vmatprep.subr.mxu0 %v785
        %883 = vmatpush1.msra.mxu0 %v784
        %884 = vmatprep.subr.mxu0 %v783
        %885 = vmatpush1.msra.mxu0 %v782
        %886 = vmatprep.subr.mxu0 %v781
        %887 = vmatpush1.msra.mxu0 %v780
        %888 = vmatprep.subr.mxu0 %v843
        %889 = vmatpush2.msra.mxu0 %v842
        %890 = vmatprep.subr.mxu0 %v841
        %891 = vmatpush2.msra.mxu0 %v840
        %892 = vmatprep.subr.mxu0 %v839
        %893 = vmatpush2.msra.mxu0 %v838
        %894 = vmatprep.subr.mxu0 %v837
        %895 = vmatpush2.msra.mxu0 %v836
        %896 = vmatprep.subr.mxu0 %v835
        %897 = vmatpush2.msra.mxu0 %v834
        %898 = vmatprep.subr.mxu0 %v833
        %899 = vmatpush2.msra.mxu0 %v832
        %900 = vmatprep.subr.mxu0 %v831
        %901 = vmatpush2.msra.mxu0 %v830
        %902 = vmatprep.subr.mxu0 %v829
        %903 = vmatpush2.msra.mxu0 %v828
        %904 = vmatprep.subr.mxu0 %v827
        %905 = vmatpush2.msra.mxu0 %v826
        %906 = vmatprep.subr.mxu0 %v825
        %907 = vmatpush2.msra.mxu0 %v824
        %908 = vmatprep.subr.mxu0 %v823
        %909 = vmatpush2.msra.mxu0 %v822
        %910 = vmatprep.subr.mxu0 %v821
        %911 = vmatpush2.msra.mxu0 %v820
        %912 = vmatprep.subr.mxu0 %v819
        %913 = vmatpush2.msra.mxu0 %v818
        %914 = vmatprep.subr.mxu0 %v817
        %915 = vmatpush2.msra.mxu0 %v816
        %916 = vmatprep.subr.mxu0 %v815
        %917 = vmatpush2.msra.mxu0 %v814
        %918 = vmatprep.subr.mxu0 %v813
        %919 = vmatpush2.msra.mxu0 %v812
        %920 = vmatprep.mubr.f32.mxu0 %v779
        %921 = vmatmul.mubr.f32.gmra.mxu0 %v778
        %v922 = vpop.f32.mrf.mxu0
        %v923 = vadd.f32 %v849, %v922
        %v924 = vpop.f32.mrf.mxu0
        %v925 = vadd.f32 %v853, %v924
        %926 = vdwg.mxu0
        %v927 = vld [vmem:[%s10] sm:$0x3]
        %v928 = vstv %s524
        %v929 = vmul.f32 %v928, %v927
        %v931 = vlaneseq
        %v932 = vshrl.u32 %v931, 7
        %v933 = vsub.s32 0, %v932
        %v934 = vrot.slane %v929, %v933
        %v935 = vlaneseq
        %v936 = vshrl.u32 %v935, 7
        %v937 = vsub.s32 1, %v936
        %v938 = vrot.slane %v929, %v937
        %v941 = vadd.f32 %v923, %v934
        %v942 = vadd.f32 %v925, %v938
        %v943 = vtanh.pop %v941
        %v944 = vtanh.pop %v942
        %v945 = vlaneseq
        %v946 = vand.u32 %v945, 127
        %v947 = vadd.s32 %v946, 128
        %vm948 = vcmp.lt.s32.totalorder %v946, 128
        %vm949 = vcmp.lt.s32.totalorder %v947, 128
        %v950 = vstv %s528
        %v951 = vsel %vm948, 1.0, %v950
        %v952 = vsel %vm949, 1.0, %v950
        %v953 = vmul.f32 %v943, %v951
        %v954 = vmul.f32 %v944, %v952
        %v955 = vld [vmem:[#allocation8] sm:$0xff]
        %v956 = vld [vmem:[#allocation8 + $0x8] sm:$0xff]
        %v957 = vld [vmem:[#allocation8 + $0x10] sm:$0xff]
        %v958 = vld [vmem:[#allocation8 + $0x18] sm:$0xff]
        %v959 = vld [vmem:[#allocation8 + $0x20] sm:$0xff]
        %v960 = vld [vmem:[#allocation8 + $0x28] sm:$0xff]
        %v961 = vld [vmem:[#allocation8 + $0x30] sm:$0xff]
        %v962 = vld [vmem:[#allocation8 + $0x38] sm:$0xff]
        %v963 = vld [vmem:[#allocation8 + $0x40] sm:$0xff]
        %v964 = vld [vmem:[#allocation8 + $0x48] sm:$0xff]
        %v965 = vld [vmem:[#allocation8 + $0x50] sm:$0xff]
        %v966 = vld [vmem:[#allocation8 + $0x58] sm:$0xff]
        %v967 = vld [vmem:[#allocation8 + $0x60] sm:$0xff]
        %v968 = vld [vmem:[#allocation8 + $0x68] sm:$0xff]
        %v969 = vld [vmem:[#allocation8 + $0x70] sm:$0xff]
        %v970 = vld [vmem:[#allocation8 + $0x78] sm:$0xff]
        %v971 = vld [vmem:[#allocation8 + $0x80] sm:$0xff]
        %v972 = vld [vmem:[#allocation8 + $0x88] sm:$0xff]
        %v973 = vld [vmem:[#allocation8 + $0x90] sm:$0xff]
        %v974 = vld [vmem:[#allocation8 + $0x98] sm:$0xff]
        %v975 = vld [vmem:[#allocation8 + $0xa0] sm:$0xff]
        %v976 = vld [vmem:[#allocation8 + $0xa8] sm:$0xff]
        %v977 = vld [vmem:[#allocation8 + $0xb0] sm:$0xff]
        %v978 = vld [vmem:[#allocation8 + $0xb8] sm:$0xff]
        %v979 = vld [vmem:[#allocation8 + $0xc0] sm:$0xff]
        %v980 = vld [vmem:[#allocation8 + $0xc8] sm:$0xff]
        %v981 = vld [vmem:[#allocation8 + $0xd0] sm:$0xff]
        %v982 = vld [vmem:[#allocation8 + $0xd8] sm:$0xff]
        %v983 = vld [vmem:[#allocation8 + $0xe0] sm:$0xff]
        %v984 = vld [vmem:[#allocation8 + $0xe8] sm:$0xff]
        %v985 = vld [vmem:[#allocation8 + $0xf0] sm:$0xff]
        %v986 = vld [vmem:[#allocation8 + $0xf8] sm:$0xff]
        %v987 = vld [vmem:[#allocation8 + $0x100] sm:$0xff]
        %v988 = vld [vmem:[#allocation8 + $0x108] sm:$0xff]
        %v989 = vld [vmem:[#allocation8 + $0x110] sm:$0xff]
        %v990 = vld [vmem:[#allocation8 + $0x118] sm:$0xff]
        %v991 = vld [vmem:[#allocation8 + $0x120] sm:$0xff]
        %v992 = vld [vmem:[#allocation8 + $0x128] sm:$0xff]
        %v993 = vld [vmem:[#allocation8 + $0x130] sm:$0xff]
        %v994 = vld [vmem:[#allocation8 + $0x138] sm:$0xff]
        %v995 = vld [vmem:[#allocation8 + $0x140] sm:$0xff]
        %v996 = vld [vmem:[#allocation8 + $0x148] sm:$0xff]
        %v997 = vld [vmem:[#allocation8 + $0x150] sm:$0xff]
        %v998 = vld [vmem:[#allocation8 + $0x158] sm:$0xff]
        %v999 = vld [vmem:[#allocation8 + $0x160] sm:$0xff]
        %v1000 = vld [vmem:[#allocation8 + $0x168] sm:$0xff]
        %v1001 = vld [vmem:[#allocation8 + $0x170] sm:$0xff]
        %v1002 = vld [vmem:[#allocation8 + $0x178] sm:$0xff]
        %v1003 = vld [vmem:[#allocation8 + $0x180] sm:$0xff]
        %v1004 = vld [vmem:[#allocation8 + $0x188] sm:$0xff]
        %v1005 = vld [vmem:[#allocation8 + $0x190] sm:$0xff]
        %v1006 = vld [vmem:[#allocation8 + $0x198] sm:$0xff]
        %v1007 = vld [vmem:[#allocation8 + $0x1a0] sm:$0xff]
        %v1008 = vld [vmem:[#allocation8 + $0x1a8] sm:$0xff]
        %v1009 = vld [vmem:[#allocation8 + $0x1b0] sm:$0xff]
        %v1010 = vld [vmem:[#allocation8 + $0x1b8] sm:$0xff]
        %v1011 = vld [vmem:[#allocation8 + $0x1c0] sm:$0xff]
        %v1012 = vld [vmem:[#allocation8 + $0x1c8] sm:$0xff]
        %v1013 = vld [vmem:[#allocation8 + $0x1d0] sm:$0xff]
        %v1014 = vld [vmem:[#allocation8 + $0x1d8] sm:$0xff]
        %v1015 = vld [vmem:[#allocation8 + $0x1e0] sm:$0xff]
        %v1016 = vld [vmem:[#allocation8 + $0x1e8] sm:$0xff]
        %v1017 = vld [vmem:[#allocation8 + $0x1f0] sm:$0xff]
        %v1018 = vld [vmem:[#allocation8 + $0x1f8] sm:$0xff]
        %1019 = vmatprep.subr.mxu0 %v986
        %1020 = vmatpush1.msra.mxu0 %v985
        %1021 = vmatprep.subr.mxu0 %v984
        %1022 = vmatpush1.msra.mxu0 %v983
        %1023 = vmatprep.subr.mxu0 %v982
        %1024 = vmatpush1.msra.mxu0 %v981
        %1025 = vmatprep.subr.mxu0 %v980
        %1026 = vmatpush1.msra.mxu0 %v979
        %1027 = vmatprep.subr.mxu0 %v978
        %1028 = vmatpush1.msra.mxu0 %v977
        %1029 = vmatprep.subr.mxu0 %v976
        %1030 = vmatpush1.msra.mxu0 %v975
        %1031 = vmatprep.subr.mxu0 %v974
        %1032 = vmatpush1.msra.mxu0 %v973
        %1033 = vmatprep.subr.mxu0 %v972
        %1034 = vmatpush1.msra.mxu0 %v971
        %1035 = vmatprep.subr.mxu0 %v970
        %1036 = vmatpush1.msra.mxu0 %v969
        %1037 = vmatprep.subr.mxu0 %v968
        %1038 = vmatpush1.msra.mxu0 %v967
        %1039 = vmatprep.subr.mxu0 %v966
        %1040 = vmatpush1.msra.mxu0 %v965
        %1041 = vmatprep.subr.mxu0 %v964
        %1042 = vmatpush1.msra.mxu0 %v963
        %1043 = vmatprep.subr.mxu0 %v962
        %1044 = vmatpush1.msra.mxu0 %v961
        %1045 = vmatprep.subr.mxu0 %v960
        %1046 = vmatpush1.msra.mxu0 %v959
        %1047 = vmatprep.subr.mxu0 %v958
        %1048 = vmatpush1.msra.mxu0 %v957
        %1049 = vmatprep.subr.mxu0 %v956
        %1050 = vmatpush1.msra.mxu0 %v955
        %1051 = vmatprep.subr.mxu0 %v1018
        %1052 = vmatpush2.msra.mxu0 %v1017
        %1053 = vmatprep.subr.mxu0 %v1016
        %1054 = vmatpush2.msra.mxu0 %v1015
        %1055 = vmatprep.subr.mxu0 %v1014
        %1056 = vmatpush2.msra.mxu0 %v1013
        %1057 = vmatprep.subr.mxu0 %v1012
        %1058 = vmatpush2.msra.mxu0 %v1011
        %1059 = vmatprep.subr.mxu0 %v1010
        %1060 = vmatpush2.msra.mxu0 %v1009
        %1061 = vmatprep.subr.mxu0 %v1008
        %1062 = vmatpush2.msra.mxu0 %v1007
        %1063 = vmatprep.subr.mxu0 %v1006
        %1064 = vmatpush2.msra.mxu0 %v1005
        %1065 = vmatprep.subr.mxu0 %v1004
        %1066 = vmatpush2.msra.mxu0 %v1003
        %1067 = vmatprep.subr.mxu0 %v1002
        %1068 = vmatpush2.msra.mxu0 %v1001
        %1069 = vmatprep.subr.mxu0 %v1000
        %1070 = vmatpush2.msra.mxu0 %v999
        %1071 = vmatprep.subr.mxu0 %v998
        %1072 = vmatpush2.msra.mxu0 %v997
        %1073 = vmatprep.subr.mxu0 %v996
        %1074 = vmatpush2.msra.mxu0 %v995
        %1075 = vmatprep.subr.mxu0 %v994
        %1076 = vmatpush2.msra.mxu0 %v993
        %1077 = vmatprep.subr.mxu0 %v992
        %1078 = vmatpush2.msra.mxu0 %v991
        %1079 = vmatprep.subr.mxu0 %v990
        %1080 = vmatpush2.msra.mxu0 %v989
        %1081 = vmatprep.subr.mxu0 %v988
        %1082 = vmatpush2.msra.mxu0 %v987
        %1083 = vmatprep.mubr.f32.mxu0 %v954
        %1084 = vmatmul.mubr.f32.gmra.mxu0 %v953
        %v1085 = vpop.f32.mrf.mxu0
        %v1086 = vadd.f32 %v692, %v1085
        %v1087 = vpop.f32.mrf.mxu0
        %v1088 = vadd.f32 %v696, %v1087
        %1089 = vdwg.mxu0
        %v1090 = vld [vmem:[%s12] sm:$0x3]
        %v1091 = vmul.f32 %v950, %v1090
        %v1093 = vlaneseq
        %v1094 = vshrl.u32 %v1093, 7
        %v1095 = vsub.s32 0, %v1094
        %v1096 = vrot.slane %v1091, %v1095
        %v1097 = vlaneseq
        %v1098 = vshrl.u32 %v1097, 7
        %v1099 = vsub.s32 1, %v1098
        %v1100 = vrot.slane %v1091, %v1099
        %v1103 = vadd.f32 %v1086, %v1096
        %v1104 = vadd.f32 %v1088, %v1100
        %v1105 = vsub.f32 %v531, %v778
        %v1106 = vsub.f32 %v532, %v779
        %v1107 = vmul.f32 %v1103, %v770
        %v1108 = vmul.f32 %v1104, %v770
        %v1109 = vadd.f32 %v1105, %v1107
        %v1110 = vadd.f32 %v1106, %v1108
        %v1111 = vstv %s530
        %v1112 = vmul.f32 %v1109, %v1111
        %v1113 = vmul.f32 %v1110, %v1111
        %v1114 = vmul.f32 %v1112, %v1112
        %v1115 = vmul.f32 %v1113, %v1113
        %v1116 = vadd.f32 %v1114, %v1115
        %1117 = vadd.xlane.f32.xlu0 %v1116
        %v1118 = vpop.xlane.xlu0 %1117
        %v1119 = vmul.f32 %v533, %v533
        %v1120 = vmul.f32 %v534, %v534
        %v1121 = vadd.f32 %v1119, %v1120
        %1122 = vadd.xlane.f32.xlu0 %v1121
        %v1123 = vpop.xlane.xlu0 %1122
        %v1124 = vsub.f32 %v1118, %v1123
        %v1125 = vmul.f32 %v1124, -0.5
        %1126 = vst [vmem:[%s13] sm:$0xff] %v778
        %1127 = vst [vmem:[%s13 + $0x8] sm:$0xff] %v779
        %v1128 = vld [vmem:[%s14] sm:$0xff]
        %v1129 = vadd.f32 %v1128, %v1125
        %vm1130 = vcmask 7168
        %1131 = vst.msk [vmem:[%s14] sm:$0xff] %vm1130, %v1129
        // Predicated region
        $region93: #{base_model_forward.1} parent=71 // pred_check
          %p1132 = pneg %p320
        $region94: #{base_model_forward.1} parent=71 // pred_check_branch
          %1134 = sbr.rel (%p1132) target = $region96
        $region95: #{base_model_forward.1} parent=71 // pred_region
          _
        $region96: #{base_model_forward.1} parent=71 // pred_fallthru
          _
        // Predicated region
        $region97: #{base_model_forward.1} parent=71 // pred_check
          %p1135 = pneg %p341
        $region98: #{base_model_forward.1} parent=71 // pred_check_branch
          %1137 = sbr.rel (%p1135) target = $region100
        $region99: #{base_model_forward.1} parent=71 // pred_region
          _
        $region100: #{base_model_forward.1} parent=71 // pred_fallthru
          _
        // Predicated region
        $region101: #{base_model_forward.1} parent=71 // pred_check
          %p1138 = pneg %p320
        $region102: #{base_model_forward.1} parent=71 // pred_check_branch
          %1140 = sbr.rel (%p1138) target = $region104
        $region103: #{base_model_forward.1} parent=71 // pred_region
          _
        $region104: #{base_model_forward.1} parent=71 // pred_fallthru
          _
        // Predicated region
        $region105: #{base_model_forward.1} parent=71 // pred_check
          %p1141 = pneg %p341
        $region106: #{base_model_forward.1} parent=71 // pred_check_branch
          %1143 = sbr.rel (%p1141) target = $region108
        $region107: #{base_model_forward.1} parent=71 // pred_region
          _
        $region108: #{base_model_forward.1} parent=71 // pred_fallthru
          _
      $region72: #{base_model_forward.1} parent=5 // pred_fallthru
        _
      %p1144 = scmp.le.s32.totalorder 2, %s24
      // Predicated region
      $region109: #{base_model_forward.1} parent=5 // pred_check
        %p1145 = pneg %p1144
      $region110: #{base_model_forward.1} parent=5 // pred_check_branch
        %1147 = sbr.rel (%p1145) target = $region112
      $region111: #{base_model_forward.1} parent=5 // pred_region
        %s1148 = ssub.s32 %s24, 2
      $region112: #{base_model_forward.1} parent=5 // pred_fallthru
        _
    $region6: #{base_model_forward.1} parent=1 // loop_footer
      %s28 = sadd.s32 1, %s24
    $region7: #{base_model_forward.1} parent=1 // loop_footer_branch
      %23 = sbr.rel target = $region3
    $region8: #{base_model_forward.1} parent=1 // loop_exit
      _
    %1149 = vsyncpa [#allocation3], 1
    %s1150 = scalar_lea.sflag [#allocation3], 1
    %1151 = vsyncpa %s1150, 1
    %1152 = vsyncpa [#allocation7], 1
    %1153 = vsyncpa [#allocation4], 1
    %s1154 = scalar_lea.sflag [#allocation4], 1
    %1155 = vsyncpa %s1154, 1

</llo_original>
